<compile_context>
chip_gen: v6e
topology: v6e:2x2x1
jax: 0.10.0
libtpu: 0.0.40
codegen_flags: <defaults>
</compile_context>

<pallas_src>
import functools

import numpy as np
import jax
import jax.numpy as jnp
from jax.experimental import pallas as pl
from jax.experimental.pallas import tpu as pltpu


# --------------------------------------------------------------------------- #
# Host-side glue: RNG + crop/pool weight construction (plain numpy, no syncs). #
# --------------------------------------------------------------------------- #
def _adaptive_pool_matrix(in_size, out_size):
    """P[i, y] = 1/len(region_i) if y in adaptive-pool region i, else 0."""
    P = np.zeros((out_size, in_size), dtype=np.float32)
    for i in range(out_size):
        start = (i * in_size) // out_size
        end = -(-((i + 1) * in_size) // out_size)  # ceil div
        P[i, start:end] = 1.0 / (end - start)
    return P


def _sample_cutout_params(key, cutn, cut_size, sideY, sideX, cut_pow):
    """All cutn sizes/offsets from ONE jax.random call -> a single host sync."""
    max_size = min(sideX, sideY)
    min_size = min(sideX, sideY, cut_size)
    u = np.asarray(jax.random.uniform(key, (cutn, 3), dtype=jnp.float32),
                   dtype=np.float64)
    sizes = (u[:, 0] ** cut_pow * (max_size - min_size) + min_size).astype(np.int64)
    offx = np.floor(u[:, 1] * (sideX - sizes + 1)).astype(np.int64)
    offy = np.floor(u[:, 2] * (sideY - sizes + 1)).astype(np.int64)
    return sizes, offy, offx


def _build_weights(cutn, cut_size, sideY, sideX, sizes, offy, offx):
    wy = np.zeros((cutn, cut_size, sideY), np.float32)   # wy[n, i, Y]
    wxt = np.zeros((cutn, sideX, cut_size), np.float32)  # wxt[n, X, j] = wx[n, j, X]
    for n in range(cutn):
        s, oy, ox = int(sizes[n]), int(offy[n]), int(offx[n])
        P = _adaptive_pool_matrix(s, cut_size)            # (cs, s)
        wy[n, :, oy:oy + s] = P
        wxt[n, ox:ox + s, :] = P.T
    return wy, wxt


# --------------------------------------------------------------------------- #
# Pallas kernel: one grid step handles k cutouts against the resident image.  #
# --------------------------------------------------------------------------- #
def _cutouts_kernel(wy_ref, wxt_ref, x_ref, o_ref, *, bc, H, cs, k):
    # wy_ref : (k, cs, H)      crop+pool weights along H for this block of cutouts
    # wxt_ref: (W, k*cs)       crop+pool weights along W (transposed), stacked
    # x_ref  : (bc*H, W)       full image flattened over (B, C, H); resident
    # o_ref  : (k, bc, cs, cs) output block
    x2d = x_ref[...]

    # --- M1: contract over W for all k cutouts in one big 2D MXU matmul. ----
    t = jnp.dot(x2d, wxt_ref[...], preferred_element_type=jnp.float32)  # (bc*H, k*cs)
    # Split the sublane dim (bc*H) -> (bc, H); layout-preserving when H % 8 == 0.
    t = t.reshape(bc, H, k * cs).astype(x2d.dtype)

    # --- M2: contract over H per cutout, batched over the bc = B*C planes. --
    for n in range(k):  # k is small & static -> fully unrolled
        wy_n = jnp.broadcast_to(wy_ref[n][None], (bc, cs, H))          # (bc, cs, H)
        t_n = t[:, :, n * cs:(n + 1) * cs]                             # (bc, H, cs)
        out_n = jnp.einsum('biy,byj->bij', wy_n, t_n,
                           preferred_element_type=jnp.float32)         # (bc, cs, cs)
        o_ref[n] = out_n.astype(o_ref.dtype)


# --------------------------------------------------------------------------- #
# Wrapper                                                                      #
# --------------------------------------------------------------------------- #
def make_cutouts(x, cut_size, cutn, cut_pow=1.0, key=None, *,
                 compute_dtype=jnp.bfloat16, cutouts_per_block=None):
    """JAX/Pallas equivalent of MakeCutouts.forward.

    Randomness is host-side and deterministic via `key` (mirrors torch's
    host RNG for sizes/offsets; same distribution, different stream).
    """
    if key is None:
        key = jax.random.PRNGKey(0)
    B, C, sideY, sideX = x.shape
    bc = B * C
    cs = cut_size

    sizes, offy, offx = _sample_cutout_params(key, cutn, cs, sideY, sideX, cut_pow)
    wy, wxt = _build_weights(cutn, cs, sideY, sideX, sizes, offy, offx)

    # ---- fold several cutouts into each grid step (amortize ~0.35us/step and
    # ---- grow M1's N), while keeping >=2 parallel steps for v7x megacore.
    if cutouts_per_block is None:
        cap = max(1, cutn // 2)
        cutouts_per_block = max(d for d in range(1, cutn + 1)
                                if cutn % d == 0 and d <= cap)
    k = cutouts_per_block
    assert cutn % k == 0, "cutouts_per_block must divide cutn"
    num_blocks = cutn // k

    # ---- operands, cast to bf16 (MXU-native) at the pallas_call boundary ----
    x2d = x.reshape(bc * sideY, sideX).astype(compute_dtype)
    wy_d = jnp.asarray(wy, dtype=compute_dtype)                      # (cutn, cs, H)
    wxt_blk = jnp.asarray(
        wxt.reshape(num_blocks, k, sideX, cs)
           .transpose(0, 2, 1, 3)
           .reshape(num_blocks, sideX, k * cs),
        dtype=compute_dtype)                                         # (nb, W, k*cs)

    kernel = functools.partial(_cutouts_kernel, bc=bc, H=sideY, cs=cs, k=k)

    x_bytes = bc * sideY * sideX * jnp.dtype(compute_dtype).itemsize
    vmem_limit = int(min(64 * 2**20, max(32 * 2**20, 6 * x_bytes)))

    def _build(single_buffer_x):
        x_kwargs = {}
        if single_buffer_x:
            # x's index_map is constant -> one buffer suffices; halves the
            # dominant VMEM cost (matters on v7x 64 MiB / v5e 16 MiB scoped).
            x_kwargs = dict(pipeline_mode=pl.Buffered(1))
        return pl.pallas_call(
            kernel,
            out_shape=jax.ShapeDtypeStruct((cutn, bc, cs, cs), x.dtype),
            grid=(num_blocks,),
            in_specs=[
                pl.BlockSpec((k, cs, sideY), lambda g: (g, 0, 0)),
                pl.BlockSpec((pl.Squeezed(), sideX, k * cs), lambda g: (g, 0, 0)),
                pl.BlockSpec((bc * sideY, sideX), lambda g: (0, 0), **x_kwargs),
            ],
            out_specs=pl.BlockSpec((k, bc, cs, cs), lambda g: (g, 0, 0, 0)),
            compiler_params=pltpu.CompilerParams(
                dimension_semantics=("parallel",),
                vmem_limit_bytes=vmem_limit),
        )

    try:
        out = _build(True)(wy_d, wxt_blk, x2d)
    except Exception:
        # pl.Buffered(1) not supported by this Pallas build -> default buffering.
        out = _build(False)(wy_d, wxt_blk, x2d)

    # (cutn, B*C, cs, cs) -> (cutn*B, C, cs, cs) == torch.cat(cutouts, dim=0)
    out = out.reshape(cutn * B, C, cs, cs)
    return out, (sizes, offy, offx)


# --------------------------------------------------------------------------- #
# Self-test                                                                    #
# --------------------------------------------------------------------------- #
def _adaptive_avg_pool2d_np(a, out_size):
    Bn, Cn, h, w = a.shape
    r = np.empty((Bn, Cn, out_size, out_size), np.float64)
    for i in range(out_size):
        ys, ye = (i * h) // out_size, -(-((i + 1) * h) // out_size)
        for j in range(out_size):
            xs, xe = (j * w) // out_size, -(-((j + 1) * w) // out_size)
            r[:, :, i, j] = a[:, :, ys:ye, xs:xe].mean(axis=(2, 3))
    return r


if __name__ == "__main__":
    B, C, side = 2, 4, 16
    cut_size, cutn, cut_pow = 8, 4, 1.0

    root = jax.random.PRNGKey(0)
    kx, krng = jax.random.split(root)
    x = jax.random.normal(kx, (B, C, side, side), dtype=jnp.float32)

    out, (sizes, offy, offx) = make_cutouts(x, cut_size, cutn, cut_pow, key=krng)
    out = jax.block_until_ready(out)

    # Independent reference: explicit crop + adaptive average pool in float64.
    x_np = np.asarray(x, dtype=np.float64)
    ref = np.concatenate(
        [_adaptive_avg_pool2d_np(
            x_np[:, :, int(offy[n]):int(offy[n]) + int(sizes[n]),
                       int(offx[n]):int(offx[n]) + int(sizes[n])], cut_size)
         for n in range(cutn)], axis=0)

    assert out.shape == (cutn * B, C, cut_size, cut_size)
    assert out.dtype == x.dtype
    # Tolerance accounts for bf16 operands (f32 accumulation); weights sum to 1
    # per output pixel, so abs error is bounded by ~1% of max|x| in the region.
    np.testing.assert_allclose(np.asarray(out, dtype=np.float64), ref,
                               rtol=5e-2, atol=5e-2)
    print("KERNEL_OK")
</pallas_src>

<mosaic_0001>
module attributes {stable_mosaic.version = 11 : i64} {
  func.func @_cutouts_kernel(%arg0: i32, %arg1: memref<2x8x16xbf16, #tpu.memory_space<vmem>>, %arg2: memref<1x16x16xbf16, #tpu.memory_space<vmem>>, %arg3: memref<128x16xbf16, #tpu.memory_space<vmem>>, %arg4: memref<2x8x8x8xf32, #tpu.memory_space<vmem>>) attributes {dimension_semantics = [#tpu.dimension_semantics<parallel>], iteration_bounds = array<i64: 2>, scalar_prefetch = 0 : i64, scratch_operands = 0 : i64, tpu.core_type = #tpu.core_type<tc>, window_params = [{transform_indices = @transform_0, window_bounds = array<i64: 2, 8, 16>}, {transform_indices = @transform_1, window_bounds = array<i64: 1, 16, 16>}, {pipeline_mode = #tpu.pipeline_mode<synchronous>, transform_indices = @transform_2, window_bounds = array<i64: 128, 16>}, {transform_indices = @transform_3, window_bounds = array<i64: 2, 8, 8, 8>}]} {
    %c0 = arith.constant 0 : index
    %c0_0 = arith.constant 0 : index
    %0 = vector.load %arg3[%c0, %c0_0] : memref<128x16xbf16, #tpu.memory_space<vmem>>, vector<128x16xbf16>
    %c0_1 = arith.constant 0 : index
    %c0_2 = arith.constant 0 : index
    %c0_3 = arith.constant 0 : index
    %1 = vector.load %arg2[%c0_1, %c0_2, %c0_3] : memref<1x16x16xbf16, #tpu.memory_space<vmem>>, vector<1x16x16xbf16>
    %2 = vector.shape_cast %1 : vector<1x16x16xbf16> to vector<16x16xbf16>
    %cst = arith.constant dense<0.000000e+00> : vector<128x16xf32>
    %3 = tpu.matmul %0, %2, %cst {dimension_numbers = #tpu.dot_dimension_numbers<[1], [0], [0], [1], [0, 0, 1, 1], [], []>} : vector<128x16xbf16>, vector<16x16xbf16>, vector<128x16xf32> -> vector<128x16xf32>
    %4 = vector.shape_cast %3 : vector<128x16xf32> to vector<8x16x16xf32>
    %5 = arith.truncf %4 : vector<8x16x16xf32> to vector<8x16x16xbf16>
    %c0_4 = arith.constant 0 : index
    %c0_5 = arith.constant 0 : index
    %c0_6 = arith.constant 0 : index
    %6 = vector.load %arg1[%c0_4, %c0_5, %c0_6] : memref<2x8x16xbf16, #tpu.memory_space<vmem>>, vector<1x8x16xbf16>
    %7 = vector.shape_cast %6 : vector<1x8x16xbf16> to vector<8x16xbf16>
    %8 = vector.shape_cast %7 : vector<8x16xbf16> to vector<1x8x16xbf16>
    %9 = vector.shape_cast %8 : vector<1x8x16xbf16> to vector<1x8x16xbf16>
    %10 = vector.broadcast %9 : vector<1x8x16xbf16> to vector<8x8x16xbf16>
    %11 = vector.extract_strided_slice %5 {offsets = [0, 0, 0], sizes = [8, 16, 8], strides = [1, 1, 1]} : vector<8x16x16xbf16> to vector<8x16x8xbf16>
    "tpu.trace_start"() <{level = 10 : i32, message = "biy,byj->bij"}> : () -> ()
    %cst_7 = arith.constant dense<0.000000e+00> : vector<8x8x8xf32>
    %12 = tpu.matmul %10, %11, %cst_7 {dimension_numbers = #tpu.dot_dimension_numbers<[2], [1], [1], [2], [0, 0, 0, 1, 1, 2], [0], [0]>} : vector<8x8x16xbf16>, vector<8x16x8xbf16>, vector<8x8x8xf32> -> vector<8x8x8xf32>
    "tpu.trace_stop"() : () -> ()
    %c0_8 = arith.constant 0 : index
    %c0_9 = arith.constant 0 : index
    %c0_10 = arith.constant 0 : index
    %c0_11 = arith.constant 0 : index
    %13 = vector.load %arg4[%c0_8, %c0_9, %c0_10, %c0_11] : memref<2x8x8x8xf32, #tpu.memory_space<vmem>>, vector<1x8x8x8xf32>
    %14 = vector.shape_cast %13 : vector<1x8x8x8xf32> to vector<8x8x8xf32>
    %15 = vector.shape_cast %12 : vector<8x8x8xf32> to vector<1x8x8x8xf32>
    tpu.vector_store %arg4[%c0_8, %c0_9, %c0_10, %c0_11], %15 {strides = array<i32>} : memref<2x8x8x8xf32, #tpu.memory_space<vmem>>, vector<1x8x8x8xf32>,
    %c1 = arith.constant 1 : index
    %c0_12 = arith.constant 0 : index
    %c0_13 = arith.constant 0 : index
    %16 = vector.load %arg1[%c1, %c0_12, %c0_13] : memref<2x8x16xbf16, #tpu.memory_space<vmem>>, vector<1x8x16xbf16>
    %17 = vector.shape_cast %16 : vector<1x8x16xbf16> to vector<8x16xbf16>
    %18 = vector.shape_cast %17 : vector<8x16xbf16> to vector<1x8x16xbf16>
    %19 = vector.shape_cast %18 : vector<1x8x16xbf16> to vector<1x8x16xbf16>
    %20 = vector.broadcast %19 : vector<1x8x16xbf16> to vector<8x8x16xbf16>
    %21 = vector.extract_strided_slice %5 {offsets = [0, 0, 8], sizes = [8, 16, 8], strides = [1, 1, 1]} : vector<8x16x16xbf16> to vector<8x16x8xbf16>
    "tpu.trace_start"() <{level = 10 : i32, message = "biy,byj->bij"}> : () -> ()
    %cst_14 = arith.constant dense<0.000000e+00> : vector<8x8x8xf32>
    %22 = tpu.matmul %20, %21, %cst_14 {dimension_numbers = #tpu.dot_dimension_numbers<[2], [1], [1], [2], [0, 0, 0, 1, 1, 2], [0], [0]>} : vector<8x8x16xbf16>, vector<8x16x8xbf16>, vector<8x8x8xf32> -> vector<8x8x8xf32>
    "tpu.trace_stop"() : () -> ()
    %c1_15 = arith.constant 1 : index
    %c0_16 = arith.constant 0 : index
    %c0_17 = arith.constant 0 : index
    %c0_18 = arith.constant 0 : index
    %23 = vector.load %arg4[%c1_15, %c0_16, %c0_17, %c0_18] : memref<2x8x8x8xf32, #tpu.memory_space<vmem>>, vector<1x8x8x8xf32>
    %24 = vector.shape_cast %23 : vector<1x8x8x8xf32> to vector<8x8x8xf32>
    %25 = vector.shape_cast %22 : vector<8x8x8xf32> to vector<1x8x8x8xf32>
    tpu.vector_store %arg4[%c1_15, %c0_16, %c0_17, %c0_18], %25 {strides = array<i32>} : memref<2x8x8x8xf32, #tpu.memory_space<vmem>>, vector<1x8x8x8xf32>,
    return
  }
  func.func @transform_0(%arg0: i32) -> (i32, i32, i32) {
    %c0_i32 = arith.constant 0 : i32
    %c0_i32_0 = arith.constant 0 : i32
    %c0_i32_1 = arith.constant 0 : i32
    return %arg0, %c0_i32, %c0_i32_0 : i32, i32, i32
  }
  func.func @transform_1(%arg0: i32) -> (i32, i32, i32) {
    %c0_i32 = arith.constant 0 : i32
    %c0_i32_0 = arith.constant 0 : i32
    %c0_i32_1 = arith.constant 0 : i32
    return %arg0, %c0_i32, %c0_i32_0 : i32, i32, i32
  }
  func.func @transform_2(%arg0: i32) -> (i32, i32) {
    %c0_i32 = arith.constant 0 : i32
    %c0_i32_0 = arith.constant 0 : i32
    %c0_i32_1 = arith.constant 0 : i32
    return %c0_i32, %c0_i32_0 : i32, i32
  }
  func.func @transform_3(%arg0: i32) -> (i32, i32, i32, i32) {
    %c0_i32 = arith.constant 0 : i32
    %c0_i32_0 = arith.constant 0 : i32
    %c0_i32_1 = arith.constant 0 : i32
    %c0_i32_2 = arith.constant 0 : i32
    return %arg0, %c0_i32, %c0_i32_0, %c0_i32_1 : i32, i32, i32, i32
  }
}

module attributes {stable_mosaic.version = 11 : i64} {
  func.func @_cutouts_kernel(%arg0: i32, %arg1: memref<2x8x16xbf16, #tpu.memory_space<vmem>>, %arg2: memref<1x16x16xbf16, #tpu.memory_space<vmem>>, %arg3: memref<128x16xbf16, #tpu.memory_space<vmem>>, %arg4: memref<2x8x8x8xf32, #tpu.memory_space<vmem>>) attributes {dimension_semantics = [#tpu.dimension_semantics<parallel>], iteration_bounds = array<i64: 2>, scalar_prefetch = 0 : i64, scratch_operands = 0 : i64, tpu.core_type = #tpu.core_type<tc>, window_params = [{transform_indices = @transform_0, window_bounds = array<i64: 2, 8, 16>}, {transform_indices = @transform_1, window_bounds = array<i64: 1, 16, 16>}, {pipeline_mode = #tpu.pipeline_mode<synchronous>, transform_indices = @transform_2, window_bounds = array<i64: 128, 16>}, {transform_indices = @transform_3, window_bounds = array<i64: 2, 8, 8, 8>}]} {
    %c0 = arith.constant 0 : index
    %c0_0 = arith.constant 0 : index
    %0 = vector.load %arg3[%c0, %c0_0] : memref<128x16xbf16, #tpu.memory_space<vmem>>, vector<128x16xbf16>
    %c0_1 = arith.constant 0 : index
    %c0_2 = arith.constant 0 : index
    %c0_3 = arith.constant 0 : index
    %1 = vector.load %arg2[%c0_1, %c0_2, %c0_3] : memref<1x16x16xbf16, #tpu.memory_space<vmem>>, vector<1x16x16xbf16>
    %2 = vector.shape_cast %1 : vector<1x16x16xbf16> to vector<16x16xbf16>
    %cst = arith.constant dense<0.000000e+00> : vector<128x16xf32>
    %3 = tpu.matmul %0, %2, %cst {dimension_numbers = #tpu.dot_dimension_numbers<[1], [0], [0], [1], [0, 0, 1, 1], [], []>} : vector<128x16xbf16>, vector<16x16xbf16>, vector<128x16xf32> -> vector<128x16xf32>
    %4 = vector.shape_cast %3 : vector<128x16xf32> to vector<8x16x16xf32>
    %5 = arith.truncf %4 : vector<8x16x16xf32> to vector<8x16x16xbf16>
    %c0_4 = arith.constant 0 : index
    %c0_5 = arith.constant 0 : index
    %c0_6 = arith.constant 0 : index
    %6 = vector.load %arg1[%c0_4, %c0_5, %c0_6] : memref<2x8x16xbf16, #tpu.memory_space<vmem>>, vector<1x8x16xbf16>
    %7 = vector.shape_cast %6 : vector<1x8x16xbf16> to vector<8x16xbf16>
    %8 = vector.shape_cast %7 : vector<8x16xbf16> to vector<1x8x16xbf16>
    %9 = vector.shape_cast %8 : vector<1x8x16xbf16> to vector<1x8x16xbf16>
    %10 = vector.broadcast %9 : vector<1x8x16xbf16> to vector<8x8x16xbf16>
    %11 = vector.extract_strided_slice %5 {offsets = [0, 0, 0], sizes = [8, 16, 8], strides = [1, 1, 1]} : vector<8x16x16xbf16> to vector<8x16x8xbf16>
    "tpu.trace_start"() <{level = 10 : i32, message = "biy,byj->bij"}> : () -> ()
    %cst_7 = arith.constant dense<0.000000e+00> : vector<8x8x8xf32>
    %12 = tpu.matmul %10, %11, %cst_7 {dimension_numbers = #tpu.dot_dimension_numbers<[2], [1], [1], [2], [0, 0, 0, 1, 1, 2], [0], [0]>} : vector<8x8x16xbf16>, vector<8x16x8xbf16>, vector<8x8x8xf32> -> vector<8x8x8xf32>
    "tpu.trace_stop"() : () -> ()
    %c0_8 = arith.constant 0 : index
    %c0_9 = arith.constant 0 : index
    %c0_10 = arith.constant 0 : index
    %c0_11 = arith.constant 0 : index
    %13 = vector.load %arg4[%c0_8, %c0_9, %c0_10, %c0_11] : memref<2x8x8x8xf32, #tpu.memory_space<vmem>>, vector<1x8x8x8xf32>
    %14 = vector.shape_cast %13 : vector<1x8x8x8xf32> to vector<8x8x8xf32>
    %15 = vector.shape_cast %12 : vector<8x8x8xf32> to vector<1x8x8x8xf32>
    tpu.vector_store %arg4[%c0_8, %c0_9, %c0_10, %c0_11], %15 {strides = array<i32>} : memref<2x8x8x8xf32, #tpu.memory_space<vmem>>, vector<1x8x8x8xf32>,
    %c1 = arith.constant 1 : index
    %c0_12 = arith.constant 0 : index
    %c0_13 = arith.constant 0 : index
    %16 = vector.load %arg1[%c1, %c0_12, %c0_13] : memref<2x8x16xbf16, #tpu.memory_space<vmem>>, vector<1x8x16xbf16>
    %17 = vector.shape_cast %16 : vector<1x8x16xbf16> to vector<8x16xbf16>
    %18 = vector.shape_cast %17 : vector<8x16xbf16> to vector<1x8x16xbf16>
    %19 = vector.shape_cast %18 : vector<1x8x16xbf16> to vector<1x8x16xbf16>
    %20 = vector.broadcast %19 : vector<1x8x16xbf16> to vector<8x8x16xbf16>
    %21 = vector.extract_strided_slice %5 {offsets = [0, 0, 8], sizes = [8, 16, 8], strides = [1, 1, 1]} : vector<8x16x16xbf16> to vector<8x16x8xbf16>
    "tpu.trace_start"() <{level = 10 : i32, message = "biy,byj->bij"}> : () -> ()
    %cst_14 = arith.constant dense<0.000000e+00> : vector<8x8x8xf32>
    %22 = tpu.matmul %20, %21, %cst_14 {dimension_numbers = #tpu.dot_dimension_numbers<[2], [1], [1], [2], [0, 0, 0, 1, 1, 2], [0], [0]>} : vector<8x8x16xbf16>, vector<8x16x8xbf16>, vector<8x8x8xf32> -> vector<8x8x8xf32>
    "tpu.trace_stop"() : () -> ()
    %c1_15 = arith.constant 1 : index
    %c0_16 = arith.constant 0 : index
    %c0_17 = arith.constant 0 : index
    %c0_18 = arith.constant 0 : index
    %23 = vector.load %arg4[%c1_15, %c0_16, %c0_17, %c0_18] : memref<2x8x8x8xf32, #tpu.memory_space<vmem>>, vector<1x8x8x8xf32>
    %24 = vector.shape_cast %23 : vector<1x8x8x8xf32> to vector<8x8x8xf32>
    %25 = vector.shape_cast %22 : vector<8x8x8xf32> to vector<1x8x8x8xf32>
    tpu.vector_store %arg4[%c1_15, %c0_16, %c0_17, %c0_18], %25 {strides = array<i32>} : memref<2x8x8x8xf32, #tpu.memory_space<vmem>>, vector<1x8x8x8xf32>,
    return
  }
  func.func @transform_0(%arg0: i32) -> (i32, i32, i32) {
    %c0_i32 = arith.constant 0 : i32
    %c0_i32_0 = arith.constant 0 : i32
    %c0_i32_1 = arith.constant 0 : i32
    return %arg0, %c0_i32, %c0_i32_0 : i32, i32, i32
  }
  func.func @transform_1(%arg0: i32) -> (i32, i32, i32) {
    %c0_i32 = arith.constant 0 : i32
    %c0_i32_0 = arith.constant 0 : i32
    %c0_i32_1 = arith.constant 0 : i32
    return %arg0, %c0_i32, %c0_i32_0 : i32, i32, i32
  }
  func.func @transform_2(%arg0: i32) -> (i32, i32) {
    %c0_i32 = arith.constant 0 : i32
    %c0_i32_0 = arith.constant 0 : i32
    %c0_i32_1 = arith.constant 0 : i32
    return %c0_i32, %c0_i32_0 : i32, i32
  }
  func.func @transform_3(%arg0: i32) -> (i32, i32, i32, i32) {
    %c0_i32 = arith.constant 0 : i32
    %c0_i32_0 = arith.constant 0 : i32
    %c0_i32_1 = arith.constant 0 : i32
    %c0_i32_2 = arith.constant 0 : i32
    return %arg0, %c0_i32, %c0_i32_0, %c0_i32_1 : i32, i32, i32, i32
  }
}

</mosaic_0001>

<llo_original>
// kernel: tpu_custom_call.1
$region0: #{tpu_custom_call.1}
  #allocation0 [shape = 'u32[]', space=smem, size = 0x4, offset = 0x4, fixed_abs, tag = 'smem constant byte address 0x4 - core index']
  #allocation1 [shape = 'u32[144,128]{1,0:T(1,128)}', space=vmem, size = 0x12000, scoped, tag = 'internal scratch']
  %s0 = inlined_call_operand.vmem [shape: bf16[4,8,16], index: 0, kind: input, shape index: {}]
  %s1 = inlined_call_operand.vmem [shape: bf16[2,16,16], index: 1, kind: input, shape index: {}]
  %s2 = inlined_call_operand.vmem [shape: bf16[128,16], index: 2, kind: input, shape index: {}]
  %s3 = inlined_call_operand.hbm [shape: f32[4,8,8,8], index: 3, kind: output, shape index: {}]
  %s4 = sld [smem:[#allocation0]]
  $region45: #{tpu_custom_call.1} parent=0
    _
  %s6 = ssub.s32 1, %s4
  %s7 = scalar_select 0, %s6, %s4
  $region1: #{tpu_custom_call.1} parent=0
    #allocation2 [shape = 'u8[131072]{0}', space=vmem, size = 0x20000, scoped, tag = 'output window, operand 0']
    #allocation3 [shape = 's32[2]{0}', space=sflag, size = 0x8, scoped, tag = 'scoped memory for tpu_custom_call.1']
    %8 = vsyncpa [#allocation3], 0
    %s9 = scalar_lea.sflag [#allocation3], 1
    %10 = vsyncpa %s9, 0
    loop: start=0, step=1, limit=4
    $region2: #{tpu_custom_call.1} parent=1 // loop_pre_header
      _
    $region3: #{tpu_custom_call.1} parent=1 // loop_header
      %s12 = sphi 0, %s16
      %p13 = scmp.ge.s32.totalorder %s12, 4
      %s22 = sphi 0, %s24
      %s25 = sphi 0, %s22
      %s26 = sphi 0, %s25
      %s42 = sphi 0, %s26
      %s48 = sphi 0, %s50
      %s51 = sphi 0, %s48
      %s52 = sphi 0, %s51
      %s68 = sphi 0, %s52
      %s72 = sphi 0, %s72
      %s74 = sphi 0, %s72
      %s75 = sphi 0, %s74
      %s89 = sphi 0, %s75
      %s95 = sphi 0, %s97
      %s98 = sphi 0, %s95
      %s99 = sphi 0, %s98
      %s115 = sphi 0, %s99
    $region4: #{tpu_custom_call.1} parent=1 // loop_header_branch
      %15 = sbr.rel (%p13) target = $region8
    $region5: #{tpu_custom_call.1} parent=1 // loop_body
      %s17 = ssub.s32 %s12, 1
      %s18 = ssub.s32 %s12, 2
      %s19 = sadd.s32 %s12, 1
      %s20 = ssub.s32 %s12, %s19
      %p21 = scmp.eq.s32.totalorder %s20, 0
      %s23 = sadd.s32 %s22, 1
      %s24 = scalar_select %p21, %s22, %s23
      %p27 = pneg %p21
      %p28 = scmp.eq.s32.totalorder %s12, 1
      %p29 = por %p27, %p28
      %p30 = scmp.ne.s32.totalorder %s22, %s25
      %p31 = scmp.eq.s32.totalorder %s12, 0
      %p32 = por %p30, %p31
      %p33 = scmp.ne.s32.totalorder %s22, %s25
      %p34 = scmp.eq.s32.totalorder %s17, 1
      %p35 = por %p33, %p34
      %p36 = scmp.ne.s32.totalorder %s25, %s26
      %p37 = scmp.eq.s32.totalorder %s17, 0
      %p38 = por %p36, %p37
      %p39 = scmp.ne.s32.totalorder %s25, %s26
      %p40 = scmp.eq.s32.totalorder %s18, 1
      %p41 = por %p39, %p40
      %p43 = scmp.ne.s32.totalorder %s26, %s42
      %p44 = scmp.eq.s32.totalorder %s18, 0
      %p45 = por %p43, %p44
      %s46 = ssub.s32 %s12, %s19
      %p47 = scmp.eq.s32.totalorder %s46, 0
      %s49 = sadd.s32 %s48, 1
      %s50 = scalar_select %p47, %s48, %s49
      %p53 = pneg %p47
      %p54 = scmp.eq.s32.totalorder %s12, 1
      %p55 = por %p53, %p54
      %p56 = scmp.ne.s32.totalorder %s48, %s51
      %p57 = scmp.eq.s32.totalorder %s12, 0
      %p58 = por %p56, %p57
      %p59 = scmp.ne.s32.totalorder %s48, %s51
      %p60 = scmp.eq.s32.totalorder %s17, 1
      %p61 = por %p59, %p60
      %p62 = scmp.ne.s32.totalorder %s51, %s52
      %p63 = scmp.eq.s32.totalorder %s17, 0
      %p64 = por %p62, %p63
      %p65 = scmp.ne.s32.totalorder %s51, %s52
      %p66 = scmp.eq.s32.totalorder %s18, 1
      %p67 = por %p65, %p66
      %p69 = scmp.ne.s32.totalorder %s52, %s68
      %p70 = scmp.eq.s32.totalorder %s18, 0
      %p71 = por %p69, %p70
      %s73 = sadd.s32 %s72, 1
      %p76 = scmp.eq.s32.totalorder %s12, 1
      %p77 = scmp.ne.s32.totalorder %s72, %s74
      %p78 = scmp.eq.s32.totalorder %s12, 0
      %p79 = por %p77, %p78
      %p80 = scmp.ne.s32.totalorder %s72, %s74
      %p81 = scmp.eq.s32.totalorder %s17, 1
      %p82 = por %p80, %p81
      %p83 = scmp.ne.s32.totalorder %s74, %s75
      %p84 = scmp.eq.s32.totalorder %s17, 0
      %p85 = por %p83, %p84
      %p86 = scmp.ne.s32.totalorder %s74, %s75
      %p87 = scmp.eq.s32.totalorder %s18, 1
      %p88 = por %p86, %p87
      %p90 = scmp.ne.s32.totalorder %s75, %s89
      %p91 = scmp.eq.s32.totalorder %s18, 0
      %p92 = por %p90, %p91
      %s93 = ssub.s32 %s12, %s19
      %p94 = scmp.eq.s32.totalorder %s93, 0
      %s96 = sadd.s32 %s95, 1
      %s97 = scalar_select %p94, %s95, %s96
      %p100 = pneg %p94
      %p101 = scmp.eq.s32.totalorder %s12, 1
      %p102 = por %p100, %p101
      %p103 = scmp.ne.s32.totalorder %s95, %s98
      %p104 = scmp.eq.s32.totalorder %s12, 0
      %p105 = por %p103, %p104
      %p106 = scmp.ne.s32.totalorder %s95, %s98
      %p107 = scmp.eq.s32.totalorder %s17, 1
      %p108 = por %p106, %p107
      %p109 = scmp.ne.s32.totalorder %s98, %s99
      %p110 = scmp.eq.s32.totalorder %s17, 0
      %p111 = por %p109, %p110
      %p112 = scmp.ne.s32.totalorder %s98, %s99
      %p113 = scmp.eq.s32.totalorder %s18, 1
      %p114 = por %p112, %p113
      %p116 = scmp.ne.s32.totalorder %s99, %s115
      %p117 = scmp.eq.s32.totalorder %s18, 0
      %p118 = por %p116, %p117
      %p119 = scmp.le.s32.totalorder 1, %s12
      %p120 = scmp.lt.s32.totalorder %s12, 3
      %p121 = pnand %p119, %p120
      %p122 = pneg %p121
      // Predicated region
      $region9: #{tpu_custom_call.1} parent=5 // pred_check
        _
      $region10: #{tpu_custom_call.1} parent=5 // pred_check_branch
        %124 = sbr.rel (%p121) target = $region12
      $region11: #{tpu_custom_call.1} parent=5 // pred_region
        %s125 = ssub.s32 %s12, 1
        // Predicated region
        $region13: #{tpu_custom_call.1} parent=11 // pred_check
          %p126 = pneg %p85
        $region14: #{tpu_custom_call.1} parent=11 // pred_check_branch
          %128 = sbr.rel (%p126) target = $region16
        $region15: #{tpu_custom_call.1} parent=11 // pred_region
          _
        $region16: #{tpu_custom_call.1} parent=11 // pred_fallthru
          _
      $region12: #{tpu_custom_call.1} parent=5 // pred_fallthru
        _
      %p129 = scmp.lt.s32.totalorder %s12, 2
      // Predicated region
      $region17: #{tpu_custom_call.1} parent=5 // pred_check
        %p130 = pneg %p129
      $region18: #{tpu_custom_call.1} parent=5 // pred_check_branch
        %132 = sbr.rel (%p130) target = $region20
      $region19: #{tpu_custom_call.1} parent=5 // pred_region
        // Predicated region
        $region21: #{tpu_custom_call.1} parent=19 // pred_check
          %p133 = pneg %p32
        $region22: #{tpu_custom_call.1} parent=19 // pred_check_branch
          %135 = sbr.rel (%p133) target = $region24
        $region23: #{tpu_custom_call.1} parent=19 // pred_region
          %s136 = smul.u32 2, %s12
          %p137 = scmp.lt.s32.totalorder %s136, 3
          %s138 = scalar_select %p137, %s136, 3
          %s139 = smul.addr %s138, 4
          %s140 = scalar_lea.vmem %s0, %s139
          %s141 = smul.u32 2, %s12
        $region24: #{tpu_custom_call.1} parent=19 // pred_fallthru
          _
        // Predicated region
        $region25: #{tpu_custom_call.1} parent=19 // pred_check
          %p142 = pneg %p58
        $region26: #{tpu_custom_call.1} parent=19 // pred_check_branch
          %144 = sbr.rel (%p142) target = $region28
        $region27: #{tpu_custom_call.1} parent=19 // pred_region
          %p145 = scmp.lt.s32.totalorder %s12, 1
          %s146 = scalar_select %p145, %s12, 1
          %s147 = smul.addr %s146, 2
          %s148 = smul.addr %s147, 4
          %s149 = scalar_lea.vmem %s1, %s148
        $region28: #{tpu_custom_call.1} parent=19 // pred_fallthru
          _
      $region20: #{tpu_custom_call.1} parent=5 // pred_fallthru
        _
      %p150 = scmp.le.s32.totalorder 1, %s12
      %p151 = scmp.lt.s32.totalorder %s12, 3
      %p152 = pnand %p150, %p151
      %p153 = pneg %p152
      // Predicated region
      $region29: #{tpu_custom_call.1} parent=5 // pred_check
        _
      $region30: #{tpu_custom_call.1} parent=5 // pred_check_branch
        %155 = sbr.rel (%p152) target = $region32
      $region31: #{tpu_custom_call.1} parent=5 // pred_region
        %s156 = ssub.s32 %s12, 1
        %s157 = smul.u32 2, %s17
        %p158 = scmp.lt.s32.totalorder %s157, 3
        %s159 = scalar_select %p158, %s157, 3
        %s160 = smul.addr %s159, 4
        %s161 = scalar_lea.vmem %s0, %s160
        %p162 = pneg %p38
        %p163 = pneg %p35
        %p164 = scmp.lt.s32.totalorder %s17, 1
        %s165 = scalar_select %p164, %s17, 1
        %s166 = smul.addr %s165, 2
        %s167 = smul.addr %s166, 4
        %s168 = scalar_lea.vmem %s1, %s167
        %p169 = pneg %p64
        %p170 = pneg %p61
        %p171 = pneg %p85
        %p172 = pneg %p82
        %p173 = pneg %p111
        %p174 = pneg %p108
        %s175 = sand.u32 %s98, 1
        %s176 = scalar_lea.sflag [#allocation3], %s175
        %s177 = sand.u32 %s98, 1
        %s178 = smul.addr %s177, 128
        %s179 = scalar_lea.vmem [#allocation2], %s178
        %s180 = smul.u32 2, %s17
        %p181 = scmp.lt.s32.totalorder %s180, 3
        %s182 = scalar_select %p181, %s180, 3
        %s183 = smul.addr %s182, 4
        %s184 = scalar_lea.vmem %s0, %s183
        %s185 = smul.u32 2, %s17
        %p186 = scmp.lt.s32.totalorder %s17, 1
        %s187 = scalar_select %p186, %s17, 1
        %s188 = smul.addr %s187, 2
        %s189 = smul.addr %s188, 4
        %s190 = scalar_lea.vmem %s1, %s189
        %s191 = smul.u32 2, %s17
        %v193 = vld [vmem:[%s2] sm:$0xf]
        %v194 = vld [vmem:[%s2 + $0x4] sm:$0xf]
        %v195 = vld [vmem:[%s2 + $0x8] sm:$0xf]
        %v196 = vld [vmem:[%s2 + $0xc] sm:$0xf]
        %v197 = vld [vmem:[%s2 + $0x10] sm:$0xf]
        %v198 = vld [vmem:[%s2 + $0x14] sm:$0xf]
        %v199 = vld [vmem:[%s2 + $0x18] sm:$0xf]
        %v200 = vld [vmem:[%s2 + $0x1c] sm:$0xf]
        %v201 = vld [vmem:[%s2 + $0x20] sm:$0xf]
        %v202 = vld [vmem:[%s2 + $0x24] sm:$0xf]
        %v203 = vld [vmem:[%s2 + $0x28] sm:$0xf]
        %v204 = vld [vmem:[%s2 + $0x2c] sm:$0xf]
        %v205 = vld [vmem:[%s2 + $0x30] sm:$0xf]
        %v206 = vld [vmem:[%s2 + $0x34] sm:$0xf]
        %v207 = vld [vmem:[%s2 + $0x38] sm:$0xf]
        %v208 = vld [vmem:[%s2 + $0x3c] sm:$0xf]
        %v209 = vld [vmem:[%s190] sm:$0xf]
        %v210 = vld [vmem:[%s190 + $0x4] sm:$0xf]
        %v227 = vunpack.c.l.b16 %v193
        %v228 = vunpack.c.l.b16 %v194
        %v229 = vunpack.c.l.b16 %v195
        %v230 = vunpack.c.l.b16 %v196
        %v231 = vunpack.c.l.b16 %v197
        %v232 = vunpack.c.l.b16 %v198
        %v233 = vunpack.c.l.b16 %v199
        %v234 = vunpack.c.l.b16 %v200
        %v235 = vunpack.c.l.b16 %v201
        %v236 = vunpack.c.l.b16 %v202
        %v237 = vunpack.c.l.b16 %v203
        %v238 = vunpack.c.l.b16 %v204
        %v239 = vunpack.c.l.b16 %v205
        %v240 = vunpack.c.l.b16 %v206
        %v241 = vunpack.c.l.b16 %v207
        %v242 = vunpack.c.l.b16 %v208
        %v243 = vpack.c.b16 %v228, %v227
        %v244 = vpack.c.b16 %v230, %v229
        %v245 = vpack.c.b16 %v232, %v231
        %v246 = vpack.c.b16 %v234, %v233
        %v247 = vpack.c.b16 %v236, %v235
        %v248 = vpack.c.b16 %v238, %v237
        %v249 = vpack.c.b16 %v240, %v239
        %v250 = vpack.c.b16 %v242, %v241
        %v253 = vunpack.c.l.b16 %v209
        %v254 = vunpack.c.l.b16 %v210
        %v255 = vpack.c.b16 %v254, %v253
        %vm257 = vcmask 130048
        %v259 = vsel %vm257, %v243, 0
        %v262 = vsel %vm257, %v244, 0
        %v265 = vsel %vm257, %v245, 0
        %v268 = vsel %vm257, %v246, 0
        %v271 = vsel %vm257, %v247, 0
        %v274 = vsel %vm257, %v248, 0
        %v277 = vsel %vm257, %v249, 0
        %v280 = vsel %vm257, %v250, 0
        %282 = vmatprep.subr.bf16.mxu0 0
        %283 = vmatpush1.bf16.msra.mxu0 0
        %284 = vmatprep.subr.bf16.mxu0 0
        %285 = vmatpush1.bf16.msra.mxu0 0
        %286 = vmatprep.subr.bf16.mxu0 0
        %287 = vmatpush1.bf16.msra.mxu0 0
        %288 = vmatprep.subr.bf16.mxu0 0
        %289 = vmatpush1.bf16.msra.mxu0 0
        %290 = vmatprep.subr.bf16.mxu0 0
        %291 = vmatpush1.bf16.msra.mxu0 0
        %292 = vmatprep.subr.bf16.mxu0 0
        %293 = vmatpush1.bf16.msra.mxu0 0
        %294 = vmatprep.subr.bf16.mxu0 0
        %295 = vmatpush1.bf16.msra.mxu0 0
        %296 = vmatprep.subr.bf16.mxu0 0
        %297 = vmatpush1.bf16.msra.mxu0 %v255
        %298 = vmatprep.subr.bf16.mxu0 0
        %299 = vmatpush2.bf16.msra.mxu0 0
        %300 = vmatprep.subr.bf16.mxu0 0
        %301 = vmatpush2.bf16.msra.mxu0 0
        %302 = vmatprep.subr.bf16.mxu0 0
        %303 = vmatpush2.bf16.msra.mxu0 0
        %304 = vmatprep.subr.bf16.mxu0 0
        %305 = vmatpush2.bf16.msra.mxu0 0
        %306 = vmatprep.subr.bf16.mxu0 0
        %307 = vmatpush2.bf16.msra.mxu0 0
        %308 = vmatprep.subr.bf16.mxu0 0
        %309 = vmatpush2.bf16.msra.mxu0 0
        %310 = vmatprep.subr.bf16.mxu0 0
        %311 = vmatpush2.bf16.msra.mxu0 0
        %312 = vmatprep.subr.bf16.mxu0 0
        %313 = vmatpush2.bf16.msra.mxu0 0
        %314 = vmatprep.mubr.bf16.mxu0 0
        %315 = vmatmul.mubr.bf16.gmra.mxu0 %v259
        %v316 = vpop.f32.mrf.mxu0
        %v317 = vadd.f32 0.0, %v316
        %v318 = vpop.f32.mrf.mxu0
        %v319 = vpop.f32.mrf.mxu0
        %v320 = vadd.f32 0.0, %v319
        %v321 = vpop.f32.mrf.mxu0
        %322 = vmatprep.mubr.bf16.mxu0 0
        %323 = vmatmul.mubr.bf16.gmra.mxu0 %v262
        %v324 = vpop.f32.mrf.mxu0
        %v325 = vadd.f32 0.0, %v324
        %v326 = vpop.f32.mrf.mxu0
        %v327 = vpop.f32.mrf.mxu0
        %v328 = vadd.f32 0.0, %v327
        %v329 = vpop.f32.mrf.mxu0
        %330 = vmatprep.mubr.bf16.mxu0 0
        %331 = vmatmul.mubr.bf16.gmra.mxu0 %v265
        %v332 = vpop.f32.mrf.mxu0
        %v333 = vadd.f32 0.0, %v332
        %v334 = vpop.f32.mrf.mxu0
        %v335 = vpop.f32.mrf.mxu0
        %v336 = vadd.f32 0.0, %v335
        %v337 = vpop.f32.mrf.mxu0
        %338 = vmatprep.mubr.bf16.mxu0 0
        %339 = vmatmul.mubr.bf16.gmra.mxu0 %v268
        %v340 = vpop.f32.mrf.mxu0
        %v341 = vadd.f32 0.0, %v340
        %v342 = vpop.f32.mrf.mxu0
        %v343 = vpop.f32.mrf.mxu0
        %v344 = vadd.f32 0.0, %v343
        %v345 = vpop.f32.mrf.mxu0
        %346 = vmatprep.mubr.bf16.mxu0 0
        %347 = vmatmul.mubr.bf16.gmra.mxu0 %v271
        %v348 = vpop.f32.mrf.mxu0
        %v349 = vadd.f32 0.0, %v348
        %v350 = vpop.f32.mrf.mxu0
        %v351 = vpop.f32.mrf.mxu0
        %v352 = vadd.f32 0.0, %v351
        %v353 = vpop.f32.mrf.mxu0
        %354 = vmatprep.mubr.bf16.mxu0 0
        %355 = vmatmul.mubr.bf16.gmra.mxu0 %v274
        %v356 = vpop.f32.mrf.mxu0
        %v357 = vadd.f32 0.0, %v356
        %v358 = vpop.f32.mrf.mxu0
        %v359 = vpop.f32.mrf.mxu0
        %v360 = vadd.f32 0.0, %v359
        %v361 = vpop.f32.mrf.mxu0
        %362 = vmatprep.mubr.bf16.mxu0 0
        %363 = vmatmul.mubr.bf16.gmra.mxu0 %v277
        %v364 = vpop.f32.mrf.mxu0
        %v365 = vadd.f32 0.0, %v364
        %v366 = vpop.f32.mrf.mxu0
        %v367 = vpop.f32.mrf.mxu0
        %v368 = vadd.f32 0.0, %v367
        %v369 = vpop.f32.mrf.mxu0
        %370 = vmatprep.mubr.bf16.mxu0 0
        %371 = vmatmul.mubr.bf16.gmra.mxu0 %v280
        %v372 = vpop.f32.mrf.mxu0
        %v373 = vadd.f32 0.0, %v372
        %v374 = vpop.f32.mrf.mxu0
        %v375 = vpop.f32.mrf.mxu0
        %v376 = vadd.f32 0.0, %v375
        %v377 = vpop.f32.mrf.mxu0
        %378 = vdwg.mxu0
        %v379 = vpack.c.bf16 %v320, %v317
        %v380 = vpack.c.bf16 %v328, %v325
        %v381 = vpack.c.bf16 %v336, %v333
        %v382 = vpack.c.bf16 %v344, %v341
        %v383 = vpack.c.bf16 %v352, %v349
        %v384 = vpack.c.bf16 %v360, %v357
        %v385 = vpack.c.bf16 %v368, %v365
        %v386 = vpack.c.bf16 %v376, %v373
        %v387 = vld [vmem:[%s184] sm:$0xf]
        %v389 = vsel %vm257, %v387, 0
        %391 = vmatprep.subr.bf16.mxu0 0
        %392 = vmatpush1.bf16.msra.mxu0 0
        %393 = vmatprep.subr.bf16.mxu0 0
        %394 = vmatpush1.bf16.msra.mxu0 0
        %395 = vmatprep.subr.bf16.mxu0 0
        %396 = vmatpush1.bf16.msra.mxu0 0
        %397 = vmatprep.subr.bf16.mxu0 0
        %398 = vmatpush1.bf16.msra.mxu0 0
        %399 = vmatprep.subr.bf16.mxu0 0
        %400 = vmatpush1.bf16.msra.mxu0 0
        %401 = vmatprep.subr.bf16.mxu0 0
        %402 = vmatpush1.bf16.msra.mxu0 0
        %403 = vmatprep.subr.bf16.mxu0 0
        %404 = vmatpush1.bf16.msra.mxu0 0
        %405 = vmatprep.subr.bf16.mxu0 0
        %406 = vmatpush1.bf16.msra.mxu0 %v379
        %407 = vmatprep.subr.bf16.mxu0 0
        %408 = vmatpush2.bf16.msra.mxu0 0
        %409 = vmatprep.subr.bf16.mxu0 0
        %410 = vmatpush2.bf16.msra.mxu0 0
        %411 = vmatprep.subr.bf16.mxu0 0
        %412 = vmatpush2.bf16.msra.mxu0 0
        %413 = vmatprep.subr.bf16.mxu0 0
        %414 = vmatpush2.bf16.msra.mxu0 0
        %415 = vmatprep.subr.bf16.mxu0 0
        %416 = vmatpush2.bf16.msra.mxu0 0
        %417 = vmatprep.subr.bf16.mxu0 0
        %418 = vmatpush2.bf16.msra.mxu0 0
        %419 = vmatprep.subr.bf16.mxu0 0
        %420 = vmatpush2.bf16.msra.mxu0 0
        %421 = vmatprep.subr.bf16.mxu0 0
        %422 = vmatpush2.bf16.msra.mxu0 0
        %423 = vmatprep.mubr.bf16.mxu0 0
        %424 = vmatmul.mubr.bf16.gmra.mxu0 %v389
        %v425 = vpop.f32.mrf.mxu0
        %v426 = vadd.f32 0.0, %v425
        %v427 = vpop.f32.mrf.mxu0
        %v428 = vpop.f32.mrf.mxu0
        %v429 = vpop.f32.mrf.mxu0
        %430 = vdwg.mxu0
        %431 = vmatprep.subr.bf16.mxu0 0
        %432 = vmatpush1.bf16.msra.mxu0 0
        %433 = vmatprep.subr.bf16.mxu0 0
        %434 = vmatpush1.bf16.msra.mxu0 0
        %435 = vmatprep.subr.bf16.mxu0 0
        %436 = vmatpush1.bf16.msra.mxu0 0
        %437 = vmatprep.subr.bf16.mxu0 0
        %438 = vmatpush1.bf16.msra.mxu0 0
        %439 = vmatprep.subr.bf16.mxu0 0
        %440 = vmatpush1.bf16.msra.mxu0 0
        %441 = vmatprep.subr.bf16.mxu0 0
        %442 = vmatpush1.bf16.msra.mxu0 0
        %443 = vmatprep.subr.bf16.mxu0 0
        %444 = vmatpush1.bf16.msra.mxu0 0
        %445 = vmatprep.subr.bf16.mxu0 0
        %446 = vmatpush1.bf16.msra.mxu0 %v380
        %447 = vmatprep.subr.bf16.mxu0 0
        %448 = vmatpush2.bf16.msra.mxu0 0
        %449 = vmatprep.subr.bf16.mxu0 0
        %450 = vmatpush2.bf16.msra.mxu0 0
        %451 = vmatprep.subr.bf16.mxu0 0
        %452 = vmatpush2.bf16.msra.mxu0 0
        %453 = vmatprep.subr.bf16.mxu0 0
        %454 = vmatpush2.bf16.msra.mxu0 0
        %455 = vmatprep.subr.bf16.mxu0 0
        %456 = vmatpush2.bf16.msra.mxu0 0
        %457 = vmatprep.subr.bf16.mxu0 0
        %458 = vmatpush2.bf16.msra.mxu0 0
        %459 = vmatprep.subr.bf16.mxu0 0
        %460 = vmatpush2.bf16.msra.mxu0 0
        %461 = vmatprep.subr.bf16.mxu0 0
        %462 = vmatpush2.bf16.msra.mxu0 0
        %463 = vmatprep.mubr.bf16.mxu0 0
        %464 = vmatmul.mubr.bf16.gmra.mxu0 %v389
        %v465 = vpop.f32.mrf.mxu0
        %v466 = vadd.f32 0.0, %v465
        %v467 = vpop.f32.mrf.mxu0
        %v468 = vpop.f32.mrf.mxu0
        %v469 = vpop.f32.mrf.mxu0
        %470 = vdwg.mxu0
        %471 = vmatprep.subr.bf16.mxu0 0
        %472 = vmatpush1.bf16.msra.mxu0 0
        %473 = vmatprep.subr.bf16.mxu0 0
        %474 = vmatpush1.bf16.msra.mxu0 0
        %475 = vmatprep.subr.bf16.mxu0 0
        %476 = vmatpush1.bf16.msra.mxu0 0
        %477 = vmatprep.subr.bf16.mxu0 0
        %478 = vmatpush1.bf16.msra.mxu0 0
        %479 = vmatprep.subr.bf16.mxu0 0
        %480 = vmatpush1.bf16.msra.mxu0 0
        %481 = vmatprep.subr.bf16.mxu0 0
        %482 = vmatpush1.bf16.msra.mxu0 0
        %483 = vmatprep.subr.bf16.mxu0 0
        %484 = vmatpush1.bf16.msra.mxu0 0
        %485 = vmatprep.subr.bf16.mxu0 0
        %486 = vmatpush1.bf16.msra.mxu0 %v381
        %487 = vmatprep.subr.bf16.mxu0 0
        %488 = vmatpush2.bf16.msra.mxu0 0
        %489 = vmatprep.subr.bf16.mxu0 0
        %490 = vmatpush2.bf16.msra.mxu0 0
        %491 = vmatprep.subr.bf16.mxu0 0
        %492 = vmatpush2.bf16.msra.mxu0 0
        %493 = vmatprep.subr.bf16.mxu0 0
        %494 = vmatpush2.bf16.msra.mxu0 0
        %495 = vmatprep.subr.bf16.mxu0 0
        %496 = vmatpush2.bf16.msra.mxu0 0
        %497 = vmatprep.subr.bf16.mxu0 0
        %498 = vmatpush2.bf16.msra.mxu0 0
        %499 = vmatprep.subr.bf16.mxu0 0
        %500 = vmatpush2.bf16.msra.mxu0 0
        %501 = vmatprep.subr.bf16.mxu0 0
        %502 = vmatpush2.bf16.msra.mxu0 0
        %503 = vmatprep.mubr.bf16.mxu0 0
        %504 = vmatmul.mubr.bf16.gmra.mxu0 %v389
        %v505 = vpop.f32.mrf.mxu0
        %v506 = vadd.f32 0.0, %v505
        %v507 = vpop.f32.mrf.mxu0
        %v508 = vpop.f32.mrf.mxu0
        %v509 = vpop.f32.mrf.mxu0
        %510 = vdwg.mxu0
        %511 = vmatprep.subr.bf16.mxu0 0
        %512 = vmatpush1.bf16.msra.mxu0 0
        %513 = vmatprep.subr.bf16.mxu0 0
        %514 = vmatpush1.bf16.msra.mxu0 0
        %515 = vmatprep.subr.bf16.mxu0 0
        %516 = vmatpush1.bf16.msra.mxu0 0
        %517 = vmatprep.subr.bf16.mxu0 0
        %518 = vmatpush1.bf16.msra.mxu0 0
        %519 = vmatprep.subr.bf16.mxu0 0
        %520 = vmatpush1.bf16.msra.mxu0 0
        %521 = vmatprep.subr.bf16.mxu0 0
        %522 = vmatpush1.bf16.msra.mxu0 0
        %523 = vmatprep.subr.bf16.mxu0 0
        %524 = vmatpush1.bf16.msra.mxu0 0
        %525 = vmatprep.subr.bf16.mxu0 0
        %526 = vmatpush1.bf16.msra.mxu0 %v382
        %527 = vmatprep.subr.bf16.mxu0 0
        %528 = vmatpush2.bf16.msra.mxu0 0
        %529 = vmatprep.subr.bf16.mxu0 0
        %530 = vmatpush2.bf16.msra.mxu0 0
        %531 = vmatprep.subr.bf16.mxu0 0
        %532 = vmatpush2.bf16.msra.mxu0 0
        %533 = vmatprep.subr.bf16.mxu0 0
        %534 = vmatpush2.bf16.msra.mxu0 0
        %535 = vmatprep.subr.bf16.mxu0 0
        %536 = vmatpush2.bf16.msra.mxu0 0
        %537 = vmatprep.subr.bf16.mxu0 0
        %538 = vmatpush2.bf16.msra.mxu0 0
        %539 = vmatprep.subr.bf16.mxu0 0
        %540 = vmatpush2.bf16.msra.mxu0 0
        %541 = vmatprep.subr.bf16.mxu0 0
        %542 = vmatpush2.bf16.msra.mxu0 0
        %543 = vmatprep.mubr.bf16.mxu0 0
        %544 = vmatmul.mubr.bf16.gmra.mxu0 %v389
        %v545 = vpop.f32.mrf.mxu0
        %v546 = vadd.f32 0.0, %v545
        %v547 = vpop.f32.mrf.mxu0
        %v548 = vpop.f32.mrf.mxu0
        %v549 = vpop.f32.mrf.mxu0
        %550 = vdwg.mxu0
        %551 = vmatprep.subr.bf16.mxu0 0
        %552 = vmatpush1.bf16.msra.mxu0 0
        %553 = vmatprep.subr.bf16.mxu0 0
        %554 = vmatpush1.bf16.msra.mxu0 0
        %555 = vmatprep.subr.bf16.mxu0 0
        %556 = vmatpush1.bf16.msra.mxu0 0
        %557 = vmatprep.subr.bf16.mxu0 0
        %558 = vmatpush1.bf16.msra.mxu0 0
        %559 = vmatprep.subr.bf16.mxu0 0
        %560 = vmatpush1.bf16.msra.mxu0 0
        %561 = vmatprep.subr.bf16.mxu0 0
        %562 = vmatpush1.bf16.msra.mxu0 0
        %563 = vmatprep.subr.bf16.mxu0 0
        %564 = vmatpush1.bf16.msra.mxu0 0
        %565 = vmatprep.subr.bf16.mxu0 0
        %566 = vmatpush1.bf16.msra.mxu0 %v383
        %567 = vmatprep.subr.bf16.mxu0 0
        %568 = vmatpush2.bf16.msra.mxu0 0
        %569 = vmatprep.subr.bf16.mxu0 0
        %570 = vmatpush2.bf16.msra.mxu0 0
        %571 = vmatprep.subr.bf16.mxu0 0
        %572 = vmatpush2.bf16.msra.mxu0 0
        %573 = vmatprep.subr.bf16.mxu0 0
        %574 = vmatpush2.bf16.msra.mxu0 0
        %575 = vmatprep.subr.bf16.mxu0 0
        %576 = vmatpush2.bf16.msra.mxu0 0
        %577 = vmatprep.subr.bf16.mxu0 0
        %578 = vmatpush2.bf16.msra.mxu0 0
        %579 = vmatprep.subr.bf16.mxu0 0
        %580 = vmatpush2.bf16.msra.mxu0 0
        %581 = vmatprep.subr.bf16.mxu0 0
        %582 = vmatpush2.bf16.msra.mxu0 0
        %583 = vmatprep.mubr.bf16.mxu0 0
        %584 = vmatmul.mubr.bf16.gmra.mxu0 %v389
        %v585 = vpop.f32.mrf.mxu0
        %v586 = vadd.f32 0.0, %v585
        %v587 = vpop.f32.mrf.mxu0
        %v588 = vpop.f32.mrf.mxu0
        %v589 = vpop.f32.mrf.mxu0
        %590 = vdwg.mxu0
        %591 = vmatprep.subr.bf16.mxu0 0
        %592 = vmatpush1.bf16.msra.mxu0 0
        %593 = vmatprep.subr.bf16.mxu0 0
        %594 = vmatpush1.bf16.msra.mxu0 0
        %595 = vmatprep.subr.bf16.mxu0 0
        %596 = vmatpush1.bf16.msra.mxu0 0
        %597 = vmatprep.subr.bf16.mxu0 0
        %598 = vmatpush1.bf16.msra.mxu0 0
        %599 = vmatprep.subr.bf16.mxu0 0
        %600 = vmatpush1.bf16.msra.mxu0 0
        %601 = vmatprep.subr.bf16.mxu0 0
        %602 = vmatpush1.bf16.msra.mxu0 0
        %603 = vmatprep.subr.bf16.mxu0 0
        %604 = vmatpush1.bf16.msra.mxu0 0
        %605 = vmatprep.subr.bf16.mxu0 0
        %606 = vmatpush1.bf16.msra.mxu0 %v384
        %607 = vmatprep.subr.bf16.mxu0 0
        %608 = vmatpush2.bf16.msra.mxu0 0
        %609 = vmatprep.subr.bf16.mxu0 0
        %610 = vmatpush2.bf16.msra.mxu0 0
        %611 = vmatprep.subr.bf16.mxu0 0
        %612 = vmatpush2.bf16.msra.mxu0 0
        %613 = vmatprep.subr.bf16.mxu0 0
        %614 = vmatpush2.bf16.msra.mxu0 0
        %615 = vmatprep.subr.bf16.mxu0 0
        %616 = vmatpush2.bf16.msra.mxu0 0
        %617 = vmatprep.subr.bf16.mxu0 0
        %618 = vmatpush2.bf16.msra.mxu0 0
        %619 = vmatprep.subr.bf16.mxu0 0
        %620 = vmatpush2.bf16.msra.mxu0 0
        %621 = vmatprep.subr.bf16.mxu0 0
        %622 = vmatpush2.bf16.msra.mxu0 0
        %623 = vmatprep.mubr.bf16.mxu0 0
        %624 = vmatmul.mubr.bf16.gmra.mxu0 %v389
        %v625 = vpop.f32.mrf.mxu0
        %v626 = vadd.f32 0.0, %v625
        %v627 = vpop.f32.mrf.mxu0
        %v628 = vpop.f32.mrf.mxu0
        %v629 = vpop.f32.mrf.mxu0
        %630 = vdwg.mxu0
        %631 = vmatprep.subr.bf16.mxu0 0
        %632 = vmatpush1.bf16.msra.mxu0 0
        %633 = vmatprep.subr.bf16.mxu0 0
        %634 = vmatpush1.bf16.msra.mxu0 0
        %635 = vmatprep.subr.bf16.mxu0 0
        %636 = vmatpush1.bf16.msra.mxu0 0
        %637 = vmatprep.subr.bf16.mxu0 0
        %638 = vmatpush1.bf16.msra.mxu0 0
        %639 = vmatprep.subr.bf16.mxu0 0
        %640 = vmatpush1.bf16.msra.mxu0 0
        %641 = vmatprep.subr.bf16.mxu0 0
        %642 = vmatpush1.bf16.msra.mxu0 0
        %643 = vmatprep.subr.bf16.mxu0 0
        %644 = vmatpush1.bf16.msra.mxu0 0
        %645 = vmatprep.subr.bf16.mxu0 0
        %646 = vmatpush1.bf16.msra.mxu0 %v385
        %647 = vmatprep.subr.bf16.mxu0 0
        %648 = vmatpush2.bf16.msra.mxu0 0
        %649 = vmatprep.subr.bf16.mxu0 0
        %650 = vmatpush2.bf16.msra.mxu0 0
        %651 = vmatprep.subr.bf16.mxu0 0
        %652 = vmatpush2.bf16.msra.mxu0 0
        %653 = vmatprep.subr.bf16.mxu0 0
        %654 = vmatpush2.bf16.msra.mxu0 0
        %655 = vmatprep.subr.bf16.mxu0 0
        %656 = vmatpush2.bf16.msra.mxu0 0
        %657 = vmatprep.subr.bf16.mxu0 0
        %658 = vmatpush2.bf16.msra.mxu0 0
        %659 = vmatprep.subr.bf16.mxu0 0
        %660 = vmatpush2.bf16.msra.mxu0 0
        %661 = vmatprep.subr.bf16.mxu0 0
        %662 = vmatpush2.bf16.msra.mxu0 0
        %663 = vmatprep.mubr.bf16.mxu0 0
        %664 = vmatmul.mubr.bf16.gmra.mxu0 %v389
        %v665 = vpop.f32.mrf.mxu0
        %v666 = vadd.f32 0.0, %v665
        %v667 = vpop.f32.mrf.mxu0
        %v668 = vpop.f32.mrf.mxu0
        %v669 = vpop.f32.mrf.mxu0
        %670 = vdwg.mxu0
        %671 = vmatprep.subr.bf16.mxu0 0
        %672 = vmatpush1.bf16.msra.mxu0 0
        %673 = vmatprep.subr.bf16.mxu0 0
        %674 = vmatpush1.bf16.msra.mxu0 0
        %675 = vmatprep.subr.bf16.mxu0 0
        %676 = vmatpush1.bf16.msra.mxu0 0
        %677 = vmatprep.subr.bf16.mxu0 0
        %678 = vmatpush1.bf16.msra.mxu0 0
        %679 = vmatprep.subr.bf16.mxu0 0
        %680 = vmatpush1.bf16.msra.mxu0 0
        %681 = vmatprep.subr.bf16.mxu0 0
        %682 = vmatpush1.bf16.msra.mxu0 0
        %683 = vmatprep.subr.bf16.mxu0 0
        %684 = vmatpush1.bf16.msra.mxu0 0
        %685 = vmatprep.subr.bf16.mxu0 0
        %686 = vmatpush1.bf16.msra.mxu0 %v386
        %687 = vmatprep.subr.bf16.mxu0 0
        %688 = vmatpush2.bf16.msra.mxu0 0
        %689 = vmatprep.subr.bf16.mxu0 0
        %690 = vmatpush2.bf16.msra.mxu0 0
        %691 = vmatprep.subr.bf16.mxu0 0
        %692 = vmatpush2.bf16.msra.mxu0 0
        %693 = vmatprep.subr.bf16.mxu0 0
        %694 = vmatpush2.bf16.msra.mxu0 0
        %695 = vmatprep.subr.bf16.mxu0 0
        %696 = vmatpush2.bf16.msra.mxu0 0
        %697 = vmatprep.subr.bf16.mxu0 0
        %698 = vmatpush2.bf16.msra.mxu0 0
        %699 = vmatprep.subr.bf16.mxu0 0
        %700 = vmatpush2.bf16.msra.mxu0 0
        %701 = vmatprep.subr.bf16.mxu0 0
        %702 = vmatpush2.bf16.msra.mxu0 0
        %703 = vmatprep.mubr.bf16.mxu0 0
        %704 = vmatmul.mubr.bf16.gmra.mxu0 %v389
        %v705 = vpop.f32.mrf.mxu0
        %v706 = vadd.f32 0.0, %v705
        %v707 = vpop.f32.mrf.mxu0
        %v708 = vpop.f32.mrf.mxu0
        %v709 = vpop.f32.mrf.mxu0
        %710 = vdwg.mxu0
        %vm711 = vcmask 64512
        %712 = vst.msk [vmem:[%s179] sm:$0xff] %vm711, %v426
        %713 = vst.msk [vmem:[%s179 + $0x8] sm:$0xff] %vm711, %v466
        %714 = vst.msk [vmem:[%s179 + $0x10] sm:$0xff] %vm711, %v506
        %715 = vst.msk [vmem:[%s179 + $0x18] sm:$0xff] %vm711, %v546
        %716 = vst.msk [vmem:[%s179 + $0x20] sm:$0xff] %vm711, %v586
        %717 = vst.msk [vmem:[%s179 + $0x28] sm:$0xff] %vm711, %v626
        %718 = vst.msk [vmem:[%s179 + $0x30] sm:$0xff] %vm711, %v666
        %719 = vst.msk [vmem:[%s179 + $0x38] sm:$0xff] %vm711, %v706
        %s720 = scalar_lea.vmem %s184, 4
        %v721 = vld [vmem:[%s720] sm:$0xf]
        %723 = vrot.lane.b32.xlu0 %v379, 120
        %v724 = vpop.permute.xlu0 %723
        %v727 = vsel %vm257, %v721, 0
        %729 = vmatprep.subr.bf16.mxu0 0
        %730 = vmatpush1.bf16.msra.mxu0 0
        %731 = vmatprep.subr.bf16.mxu0 0
        %732 = vmatpush1.bf16.msra.mxu0 0
        %733 = vmatprep.subr.bf16.mxu0 0
        %734 = vmatpush1.bf16.msra.mxu0 0
        %735 = vmatprep.subr.bf16.mxu0 0
        %736 = vmatpush1.bf16.msra.mxu0 0
        %737 = vmatprep.subr.bf16.mxu0 0
        %738 = vmatpush1.bf16.msra.mxu0 0
        %739 = vmatprep.subr.bf16.mxu0 0
        %740 = vmatpush1.bf16.msra.mxu0 0
        %741 = vmatprep.subr.bf16.mxu0 0
        %742 = vmatpush1.bf16.msra.mxu0 0
        %743 = vmatprep.subr.bf16.mxu0 0
        %744 = vmatpush1.bf16.msra.mxu0 %v724
        %745 = vmatprep.subr.bf16.mxu0 0
        %746 = vmatpush2.bf16.msra.mxu0 0
        %747 = vmatprep.subr.bf16.mxu0 0
        %748 = vmatpush2.bf16.msra.mxu0 0
        %749 = vmatprep.subr.bf16.mxu0 0
        %750 = vmatpush2.bf16.msra.mxu0 0
        %751 = vmatprep.subr.bf16.mxu0 0
        %752 = vmatpush2.bf16.msra.mxu0 0
        %753 = vmatprep.subr.bf16.mxu0 0
        %754 = vmatpush2.bf16.msra.mxu0 0
        %755 = vmatprep.subr.bf16.mxu0 0
        %756 = vmatpush2.bf16.msra.mxu0 0
        %757 = vmatprep.subr.bf16.mxu0 0
        %758 = vmatpush2.bf16.msra.mxu0 0
        %759 = vmatprep.subr.bf16.mxu0 0
        %760 = vmatpush2.bf16.msra.mxu0 0
        %761 = vmatprep.mubr.bf16.mxu0 0
        %762 = vmatmul.mubr.bf16.gmra.mxu0 %v727
        %v763 = vpop.f32.mrf.mxu0
        %v764 = vadd.f32 0.0, %v763
        %v765 = vpop.f32.mrf.mxu0
        %v766 = vpop.f32.mrf.mxu0
        %v767 = vpop.f32.mrf.mxu0
        %768 = vdwg.mxu0
        %770 = vrot.lane.b32.xlu0 %v380, 120
        %v771 = vpop.permute.xlu0 %770
        %773 = vmatprep.subr.bf16.mxu0 0
        %774 = vmatpush1.bf16.msra.mxu0 0
        %775 = vmatprep.subr.bf16.mxu0 0
        %776 = vmatpush1.bf16.msra.mxu0 0
        %777 = vmatprep.subr.bf16.mxu0 0
        %778 = vmatpush1.bf16.msra.mxu0 0
        %779 = vmatprep.subr.bf16.mxu0 0
        %780 = vmatpush1.bf16.msra.mxu0 0
        %781 = vmatprep.subr.bf16.mxu0 0
        %782 = vmatpush1.bf16.msra.mxu0 0
        %783 = vmatprep.subr.bf16.mxu0 0
        %784 = vmatpush1.bf16.msra.mxu0 0
        %785 = vmatprep.subr.bf16.mxu0 0
        %786 = vmatpush1.bf16.msra.mxu0 0
        %787 = vmatprep.subr.bf16.mxu0 0
        %788 = vmatpush1.bf16.msra.mxu0 %v771
        %789 = vmatprep.subr.bf16.mxu0 0
        %790 = vmatpush2.bf16.msra.mxu0 0
        %791 = vmatprep.subr.bf16.mxu0 0
        %792 = vmatpush2.bf16.msra.mxu0 0
        %793 = vmatprep.subr.bf16.mxu0 0
        %794 = vmatpush2.bf16.msra.mxu0 0
        %795 = vmatprep.subr.bf16.mxu0 0
        %796 = vmatpush2.bf16.msra.mxu0 0
        %797 = vmatprep.subr.bf16.mxu0 0
        %798 = vmatpush2.bf16.msra.mxu0 0
        %799 = vmatprep.subr.bf16.mxu0 0
        %800 = vmatpush2.bf16.msra.mxu0 0
        %801 = vmatprep.subr.bf16.mxu0 0
        %802 = vmatpush2.bf16.msra.mxu0 0
        %803 = vmatprep.subr.bf16.mxu0 0
        %804 = vmatpush2.bf16.msra.mxu0 0
        %805 = vmatprep.mubr.bf16.mxu0 0
        %806 = vmatmul.mubr.bf16.gmra.mxu0 %v727
        %v807 = vpop.f32.mrf.mxu0
        %v808 = vadd.f32 0.0, %v807
        %v809 = vpop.f32.mrf.mxu0
        %v810 = vpop.f32.mrf.mxu0
        %v811 = vpop.f32.mrf.mxu0
        %812 = vdwg.mxu0
        %814 = vrot.lane.b32.xlu0 %v381, 120
        %v815 = vpop.permute.xlu0 %814
        %817 = vmatprep.subr.bf16.mxu0 0
        %818 = vmatpush1.bf16.msra.mxu0 0
        %819 = vmatprep.subr.bf16.mxu0 0
        %820 = vmatpush1.bf16.msra.mxu0 0
        %821 = vmatprep.subr.bf16.mxu0 0
        %822 = vmatpush1.bf16.msra.mxu0 0
        %823 = vmatprep.subr.bf16.mxu0 0
        %824 = vmatpush1.bf16.msra.mxu0 0
        %825 = vmatprep.subr.bf16.mxu0 0
        %826 = vmatpush1.bf16.msra.mxu0 0
        %827 = vmatprep.subr.bf16.mxu0 0
        %828 = vmatpush1.bf16.msra.mxu0 0
        %829 = vmatprep.subr.bf16.mxu0 0
        %830 = vmatpush1.bf16.msra.mxu0 0
        %831 = vmatprep.subr.bf16.mxu0 0
        %832 = vmatpush1.bf16.msra.mxu0 %v815
        %833 = vmatprep.subr.bf16.mxu0 0
        %834 = vmatpush2.bf16.msra.mxu0 0
        %835 = vmatprep.subr.bf16.mxu0 0
        %836 = vmatpush2.bf16.msra.mxu0 0
        %837 = vmatprep.subr.bf16.mxu0 0
        %838 = vmatpush2.bf16.msra.mxu0 0
        %839 = vmatprep.subr.bf16.mxu0 0
        %840 = vmatpush2.bf16.msra.mxu0 0
        %841 = vmatprep.subr.bf16.mxu0 0
        %842 = vmatpush2.bf16.msra.mxu0 0
        %843 = vmatprep.subr.bf16.mxu0 0
        %844 = vmatpush2.bf16.msra.mxu0 0
        %845 = vmatprep.subr.bf16.mxu0 0
        %846 = vmatpush2.bf16.msra.mxu0 0
        %847 = vmatprep.subr.bf16.mxu0 0
        %848 = vmatpush2.bf16.msra.mxu0 0
        %849 = vmatprep.mubr.bf16.mxu0 0
        %850 = vmatmul.mubr.bf16.gmra.mxu0 %v727
        %v851 = vpop.f32.mrf.mxu0
        %v852 = vadd.f32 0.0, %v851
        %v853 = vpop.f32.mrf.mxu0
        %v854 = vpop.f32.mrf.mxu0
        %v855 = vpop.f32.mrf.mxu0
        %856 = vdwg.mxu0
        %858 = vrot.lane.b32.xlu0 %v382, 120
        %v859 = vpop.permute.xlu0 %858
        %861 = vmatprep.subr.bf16.mxu0 0
        %862 = vmatpush1.bf16.msra.mxu0 0
        %863 = vmatprep.subr.bf16.mxu0 0
        %864 = vmatpush1.bf16.msra.mxu0 0
        %865 = vmatprep.subr.bf16.mxu0 0
        %866 = vmatpush1.bf16.msra.mxu0 0
        %867 = vmatprep.subr.bf16.mxu0 0
        %868 = vmatpush1.bf16.msra.mxu0 0
        %869 = vmatprep.subr.bf16.mxu0 0
        %870 = vmatpush1.bf16.msra.mxu0 0
        %871 = vmatprep.subr.bf16.mxu0 0
        %872 = vmatpush1.bf16.msra.mxu0 0
        %873 = vmatprep.subr.bf16.mxu0 0
        %874 = vmatpush1.bf16.msra.mxu0 0
        %875 = vmatprep.subr.bf16.mxu0 0
        %876 = vmatpush1.bf16.msra.mxu0 %v859
        %877 = vmatprep.subr.bf16.mxu0 0
        %878 = vmatpush2.bf16.msra.mxu0 0
        %879 = vmatprep.subr.bf16.mxu0 0
        %880 = vmatpush2.bf16.msra.mxu0 0
        %881 = vmatprep.subr.bf16.mxu0 0
        %882 = vmatpush2.bf16.msra.mxu0 0
        %883 = vmatprep.subr.bf16.mxu0 0
        %884 = vmatpush2.bf16.msra.mxu0 0
        %885 = vmatprep.subr.bf16.mxu0 0
        %886 = vmatpush2.bf16.msra.mxu0 0
        %887 = vmatprep.subr.bf16.mxu0 0
        %888 = vmatpush2.bf16.msra.mxu0 0
        %889 = vmatprep.subr.bf16.mxu0 0
        %890 = vmatpush2.bf16.msra.mxu0 0
        %891 = vmatprep.subr.bf16.mxu0 0
        %892 = vmatpush2.bf16.msra.mxu0 0
        %893 = vmatprep.mubr.bf16.mxu0 0
        %894 = vmatmul.mubr.bf16.gmra.mxu0 %v727
        %v895 = vpop.f32.mrf.mxu0
        %v896 = vadd.f32 0.0, %v895
        %v897 = vpop.f32.mrf.mxu0
        %v898 = vpop.f32.mrf.mxu0
        %v899 = vpop.f32.mrf.mxu0
        %900 = vdwg.mxu0
        %902 = vrot.lane.b32.xlu0 %v383, 120
        %v903 = vpop.permute.xlu0 %902
        %905 = vmatprep.subr.bf16.mxu0 0
        %906 = vmatpush1.bf16.msra.mxu0 0
        %907 = vmatprep.subr.bf16.mxu0 0
        %908 = vmatpush1.bf16.msra.mxu0 0
        %909 = vmatprep.subr.bf16.mxu0 0
        %910 = vmatpush1.bf16.msra.mxu0 0
        %911 = vmatprep.subr.bf16.mxu0 0
        %912 = vmatpush1.bf16.msra.mxu0 0
        %913 = vmatprep.subr.bf16.mxu0 0
        %914 = vmatpush1.bf16.msra.mxu0 0
        %915 = vmatprep.subr.bf16.mxu0 0
        %916 = vmatpush1.bf16.msra.mxu0 0
        %917 = vmatprep.subr.bf16.mxu0 0
        %918 = vmatpush1.bf16.msra.mxu0 0
        %919 = vmatprep.subr.bf16.mxu0 0
        %920 = vmatpush1.bf16.msra.mxu0 %v903
        %921 = vmatprep.subr.bf16.mxu0 0
        %922 = vmatpush2.bf16.msra.mxu0 0
        %923 = vmatprep.subr.bf16.mxu0 0
        %924 = vmatpush2.bf16.msra.mxu0 0
        %925 = vmatprep.subr.bf16.mxu0 0
        %926 = vmatpush2.bf16.msra.mxu0 0
        %927 = vmatprep.subr.bf16.mxu0 0
        %928 = vmatpush2.bf16.msra.mxu0 0
        %929 = vmatprep.subr.bf16.mxu0 0
        %930 = vmatpush2.bf16.msra.mxu0 0
        %931 = vmatprep.subr.bf16.mxu0 0
        %932 = vmatpush2.bf16.msra.mxu0 0
        %933 = vmatprep.subr.bf16.mxu0 0
        %934 = vmatpush2.bf16.msra.mxu0 0
        %935 = vmatprep.subr.bf16.mxu0 0
        %936 = vmatpush2.bf16.msra.mxu0 0
        %937 = vmatprep.mubr.bf16.mxu0 0
        %938 = vmatmul.mubr.bf16.gmra.mxu0 %v727
        %v939 = vpop.f32.mrf.mxu0
        %v940 = vadd.f32 0.0, %v939
        %v941 = vpop.f32.mrf.mxu0
        %v942 = vpop.f32.mrf.mxu0
        %v943 = vpop.f32.mrf.mxu0
        %944 = vdwg.mxu0
        %946 = vrot.lane.b32.xlu0 %v384, 120
        %v947 = vpop.permute.xlu0 %946
        %949 = vmatprep.subr.bf16.mxu0 0
        %950 = vmatpush1.bf16.msra.mxu0 0
        %951 = vmatprep.subr.bf16.mxu0 0
        %952 = vmatpush1.bf16.msra.mxu0 0
        %953 = vmatprep.subr.bf16.mxu0 0
        %954 = vmatpush1.bf16.msra.mxu0 0
        %955 = vmatprep.subr.bf16.mxu0 0
        %956 = vmatpush1.bf16.msra.mxu0 0
        %957 = vmatprep.subr.bf16.mxu0 0
        %958 = vmatpush1.bf16.msra.mxu0 0
        %959 = vmatprep.subr.bf16.mxu0 0
        %960 = vmatpush1.bf16.msra.mxu0 0
        %961 = vmatprep.subr.bf16.mxu0 0
        %962 = vmatpush1.bf16.msra.mxu0 0
        %963 = vmatprep.subr.bf16.mxu0 0
        %964 = vmatpush1.bf16.msra.mxu0 %v947
        %965 = vmatprep.subr.bf16.mxu0 0
        %966 = vmatpush2.bf16.msra.mxu0 0
        %967 = vmatprep.subr.bf16.mxu0 0
        %968 = vmatpush2.bf16.msra.mxu0 0
        %969 = vmatprep.subr.bf16.mxu0 0
        %970 = vmatpush2.bf16.msra.mxu0 0
        %971 = vmatprep.subr.bf16.mxu0 0
        %972 = vmatpush2.bf16.msra.mxu0 0
        %973 = vmatprep.subr.bf16.mxu0 0
        %974 = vmatpush2.bf16.msra.mxu0 0
        %975 = vmatprep.subr.bf16.mxu0 0
        %976 = vmatpush2.bf16.msra.mxu0 0
        %977 = vmatprep.subr.bf16.mxu0 0
        %978 = vmatpush2.bf16.msra.mxu0 0
        %979 = vmatprep.subr.bf16.mxu0 0
        %980 = vmatpush2.bf16.msra.mxu0 0
        %981 = vmatprep.mubr.bf16.mxu0 0
        %982 = vmatmul.mubr.bf16.gmra.mxu0 %v727
        %v983 = vpop.f32.mrf.mxu0
        %v984 = vadd.f32 0.0, %v983
        %v985 = vpop.f32.mrf.mxu0
        %v986 = vpop.f32.mrf.mxu0
        %v987 = vpop.f32.mrf.mxu0
        %988 = vdwg.mxu0
        %990 = vrot.lane.b32.xlu0 %v385, 120
        %v991 = vpop.permute.xlu0 %990
        %993 = vmatprep.subr.bf16.mxu0 0
        %994 = vmatpush1.bf16.msra.mxu0 0
        %995 = vmatprep.subr.bf16.mxu0 0
        %996 = vmatpush1.bf16.msra.mxu0 0
        %997 = vmatprep.subr.bf16.mxu0 0
        %998 = vmatpush1.bf16.msra.mxu0 0
        %999 = vmatprep.subr.bf16.mxu0 0
        %1000 = vmatpush1.bf16.msra.mxu0 0
        %1001 = vmatprep.subr.bf16.mxu0 0
        %1002 = vmatpush1.bf16.msra.mxu0 0
        %1003 = vmatprep.subr.bf16.mxu0 0
        %1004 = vmatpush1.bf16.msra.mxu0 0
        %1005 = vmatprep.subr.bf16.mxu0 0
        %1006 = vmatpush1.bf16.msra.mxu0 0
        %1007 = vmatprep.subr.bf16.mxu0 0
        %1008 = vmatpush1.bf16.msra.mxu0 %v991
        %1009 = vmatprep.subr.bf16.mxu0 0
        %1010 = vmatpush2.bf16.msra.mxu0 0
        %1011 = vmatprep.subr.bf16.mxu0 0
        %1012 = vmatpush2.bf16.msra.mxu0 0
        %1013 = vmatprep.subr.bf16.mxu0 0
        %1014 = vmatpush2.bf16.msra.mxu0 0
        %1015 = vmatprep.subr.bf16.mxu0 0
        %1016 = vmatpush2.bf16.msra.mxu0 0
        %1017 = vmatprep.subr.bf16.mxu0 0
        %1018 = vmatpush2.bf16.msra.mxu0 0
        %1019 = vmatprep.subr.bf16.mxu0 0
        %1020 = vmatpush2.bf16.msra.mxu0 0
        %1021 = vmatprep.subr.bf16.mxu0 0
        %1022 = vmatpush2.bf16.msra.mxu0 0
        %1023 = vmatprep.subr.bf16.mxu0 0
        %1024 = vmatpush2.bf16.msra.mxu0 0
        %1025 = vmatprep.mubr.bf16.mxu0 0
        %1026 = vmatmul.mubr.bf16.gmra.mxu0 %v727
        %v1027 = vpop.f32.mrf.mxu0
        %v1028 = vadd.f32 0.0, %v1027
        %v1029 = vpop.f32.mrf.mxu0
        %v1030 = vpop.f32.mrf.mxu0
        %v1031 = vpop.f32.mrf.mxu0
        %1032 = vdwg.mxu0
        %1034 = vrot.lane.b32.xlu0 %v386, 120
        %v1035 = vpop.permute.xlu0 %1034
        %1037 = vmatprep.subr.bf16.mxu0 0
        %1038 = vmatpush1.bf16.msra.mxu0 0
        %1039 = vmatprep.subr.bf16.mxu0 0
        %1040 = vmatpush1.bf16.msra.mxu0 0
        %1041 = vmatprep.subr.bf16.mxu0 0
        %1042 = vmatpush1.bf16.msra.mxu0 0
        %1043 = vmatprep.subr.bf16.mxu0 0
        %1044 = vmatpush1.bf16.msra.mxu0 0
        %1045 = vmatprep.subr.bf16.mxu0 0
        %1046 = vmatpush1.bf16.msra.mxu0 0
        %1047 = vmatprep.subr.bf16.mxu0 0
        %1048 = vmatpush1.bf16.msra.mxu0 0
        %1049 = vmatprep.subr.bf16.mxu0 0
        %1050 = vmatpush1.bf16.msra.mxu0 0
        %1051 = vmatprep.subr.bf16.mxu0 0
        %1052 = vmatpush1.bf16.msra.mxu0 %v1035
        %1053 = vmatprep.subr.bf16.mxu0 0
        %1054 = vmatpush2.bf16.msra.mxu0 0
        %1055 = vmatprep.subr.bf16.mxu0 0
        %1056 = vmatpush2.bf16.msra.mxu0 0
        %1057 = vmatprep.subr.bf16.mxu0 0
        %1058 = vmatpush2.bf16.msra.mxu0 0
        %1059 = vmatprep.subr.bf16.mxu0 0
        %1060 = vmatpush2.bf16.msra.mxu0 0
        %1061 = vmatprep.subr.bf16.mxu0 0
        %1062 = vmatpush2.bf16.msra.mxu0 0
        %1063 = vmatprep.subr.bf16.mxu0 0
        %1064 = vmatpush2.bf16.msra.mxu0 0
        %1065 = vmatprep.subr.bf16.mxu0 0
        %1066 = vmatpush2.bf16.msra.mxu0 0
        %1067 = vmatprep.subr.bf16.mxu0 0
        %1068 = vmatpush2.bf16.msra.mxu0 0
        %1069 = vmatprep.mubr.bf16.mxu0 0
        %1070 = vmatmul.mubr.bf16.gmra.mxu0 %v727
        %v1071 = vpop.f32.mrf.mxu0
        %v1072 = vadd.f32 0.0, %v1071
        %v1073 = vpop.f32.mrf.mxu0
        %v1074 = vpop.f32.mrf.mxu0
        %v1075 = vpop.f32.mrf.mxu0
        %1076 = vdwg.mxu0
        %s1077 = scalar_lea.vmem %s179, 64 [#allocation2]
        %1078 = vst.msk [vmem:[%s1077] sm:$0xff] %vm711, %v764
        %1079 = vst.msk [vmem:[%s1077 + $0x8] sm:$0xff] %vm711, %v808
        %1080 = vst.msk [vmem:[%s1077 + $0x10] sm:$0xff] %vm711, %v852
        %1081 = vst.msk [vmem:[%s1077 + $0x18] sm:$0xff] %vm711, %v896
        %1082 = vst.msk [vmem:[%s1077 + $0x20] sm:$0xff] %vm711, %v940
        %1083 = vst.msk [vmem:[%s1077 + $0x28] sm:$0xff] %vm711, %v984
        %1084 = vst.msk [vmem:[%s1077 + $0x30] sm:$0xff] %vm711, %v1028
        %1085 = vst.msk [vmem:[%s1077 + $0x38] sm:$0xff] %vm711, %v1072
        %s1086 = sand.u32 %s98, 1
        %s1087 = scalar_lea.sflag [#allocation3], %s1086
        %s1088 = sand.u32 %s98, 1
        %s1089 = smul.addr %s1088, 128
        %s1090 = scalar_lea.vmem [#allocation2], %s1089
        // Predicated region
        $region33: #{tpu_custom_call.1} parent=31 // pred_check
          %p1091 = pneg %p108
        $region34: #{tpu_custom_call.1} parent=31 // pred_check_branch
          %1093 = sbr.rel (%p1091) target = $region36
        $region35: #{tpu_custom_call.1} parent=31 // pred_region
          %s1094 = smul.u32 2, %s17
          %s1096 = ssub.s32 2048, 2048
          %1097 = vsyncadd %s1087, %s1096
          %s1098 = smul.addr %s1094, 8
          %s1099 = smul.addr %s1098, 128
          %s1100 = scalar_lea.hbm %s3, %s1099
          %s1101 = sshll.u32 %s1090, 4
          %s1102 = int_to_ptr.vmem [resolvable:$true] %s1101
          %1107 = dma.vmem_to_hbm [thread:$0]  %s1102, 2048, %s1100, %s1087, 128, 128, 8
        $region36: #{tpu_custom_call.1} parent=31 // pred_fallthru
          _
      $region32: #{tpu_custom_call.1} parent=5 // pred_fallthru
        _
      %p1108 = scmp.le.s32.totalorder 2, %s12
      // Predicated region
      $region37: #{tpu_custom_call.1} parent=5 // pred_check
        %p1109 = pneg %p1108
      $region38: #{tpu_custom_call.1} parent=5 // pred_check_branch
        %1111 = sbr.rel (%p1109) target = $region40
      $region39: #{tpu_custom_call.1} parent=5 // pred_region
        %s1112 = ssub.s32 %s12, 2
        // Predicated region
        $region41: #{tpu_custom_call.1} parent=39 // pred_check
          %p1113 = pneg %p114
        $region42: #{tpu_custom_call.1} parent=39 // pred_check_branch
          %1115 = sbr.rel (%p1113) target = $region44
        $region43: #{tpu_custom_call.1} parent=39 // pred_region
          %s1116 = sand.u32 %s99, 1
          %s1117 = scalar_lea.sflag [#allocation3], %s1116
          %s1118 = sand.u32 %s99, 1
          %s1119 = smul.addr %s1118, 128
          %s1120 = scalar_lea.vmem [#allocation2], %s1119
          %1121 = dma.done %s1117, 2048
        $region44: #{tpu_custom_call.1} parent=39 // pred_fallthru
          _
      $region40: #{tpu_custom_call.1} parent=5 // pred_fallthru
        _
    $region6: #{tpu_custom_call.1} parent=1 // loop_footer
      %s16 = sadd.s32 1, %s12
    $region7: #{tpu_custom_call.1} parent=1 // loop_footer_branch
      %11 = sbr.rel target = $region3
    $region8: #{tpu_custom_call.1} parent=1 // loop_exit
      _
    %1122 = vsyncpa [#allocation3], 1
    %s1123 = scalar_lea.sflag [#allocation3], 1
    %1124 = vsyncpa %s1123, 1

// kernel: tpu_custom_call.1
$region0: #{tpu_custom_call.1}
  #allocation0 [shape = 'u32[]', space=smem, size = 0x4, offset = 0x4, fixed_abs, tag = 'smem constant byte address 0x4 - core index']
  #allocation1 [shape = 'u32[144,128]{1,0:T(1,128)}', space=vmem, size = 0x12000, scoped, tag = 'internal scratch']
  %s0 = inlined_call_operand.vmem [shape: bf16[4,8,16], index: 0, kind: input, shape index: {}]
  %s1 = inlined_call_operand.vmem [shape: bf16[2,16,16], index: 1, kind: input, shape index: {}]
  %s2 = inlined_call_operand.vmem [shape: bf16[128,16], index: 2, kind: input, shape index: {}]
  %s3 = inlined_call_operand.hbm [shape: f32[4,8,8,8], index: 3, kind: output, shape index: {}]
  %s4 = sld [smem:[#allocation0]]
  $region45: #{tpu_custom_call.1} parent=0
    _
  %s6 = ssub.s32 1, %s4
  %s7 = scalar_select 0, %s6, %s4
  $region1: #{tpu_custom_call.1} parent=0
    #allocation2 [shape = 'u8[131072]{0}', space=vmem, size = 0x20000, scoped, tag = 'output window, operand 0']
    #allocation3 [shape = 's32[2]{0}', space=sflag, size = 0x8, scoped, tag = 'scoped memory for tpu_custom_call.1']
    %8 = vsyncpa [#allocation3], 0
    %s9 = scalar_lea.sflag [#allocation3], 1
    %10 = vsyncpa %s9, 0
    loop: start=0, step=1, limit=4
    $region2: #{tpu_custom_call.1} parent=1 // loop_pre_header
      _
    $region3: #{tpu_custom_call.1} parent=1 // loop_header
      %s12 = sphi 0, %s16
      %p13 = scmp.ge.s32.totalorder %s12, 4
      %s22 = sphi 0, %s24
      %s25 = sphi 0, %s22
      %s26 = sphi 0, %s25
      %s42 = sphi 0, %s26
      %s48 = sphi 0, %s50
      %s51 = sphi 0, %s48
      %s52 = sphi 0, %s51
      %s68 = sphi 0, %s52
      %s72 = sphi 0, %s72
      %s74 = sphi 0, %s72
      %s75 = sphi 0, %s74
      %s89 = sphi 0, %s75
      %s95 = sphi 0, %s97
      %s98 = sphi 0, %s95
      %s99 = sphi 0, %s98
      %s115 = sphi 0, %s99
    $region4: #{tpu_custom_call.1} parent=1 // loop_header_branch
      %15 = sbr.rel (%p13) target = $region8
    $region5: #{tpu_custom_call.1} parent=1 // loop_body
      %s17 = ssub.s32 %s12, 1
      %s18 = ssub.s32 %s12, 2
      %s19 = sadd.s32 %s12, 1
      %s20 = ssub.s32 %s12, %s19
      %p21 = scmp.eq.s32.totalorder %s20, 0
      %s23 = sadd.s32 %s22, 1
      %s24 = scalar_select %p21, %s22, %s23
      %p27 = pneg %p21
      %p28 = scmp.eq.s32.totalorder %s12, 1
      %p29 = por %p27, %p28
      %p30 = scmp.ne.s32.totalorder %s22, %s25
      %p31 = scmp.eq.s32.totalorder %s12, 0
      %p32 = por %p30, %p31
      %p33 = scmp.ne.s32.totalorder %s22, %s25
      %p34 = scmp.eq.s32.totalorder %s17, 1
      %p35 = por %p33, %p34
      %p36 = scmp.ne.s32.totalorder %s25, %s26
      %p37 = scmp.eq.s32.totalorder %s17, 0
      %p38 = por %p36, %p37
      %p39 = scmp.ne.s32.totalorder %s25, %s26
      %p40 = scmp.eq.s32.totalorder %s18, 1
      %p41 = por %p39, %p40
      %p43 = scmp.ne.s32.totalorder %s26, %s42
      %p44 = scmp.eq.s32.totalorder %s18, 0
      %p45 = por %p43, %p44
      %s46 = ssub.s32 %s12, %s19
      %p47 = scmp.eq.s32.totalorder %s46, 0
      %s49 = sadd.s32 %s48, 1
      %s50 = scalar_select %p47, %s48, %s49
      %p53 = pneg %p47
      %p54 = scmp.eq.s32.totalorder %s12, 1
      %p55 = por %p53, %p54
      %p56 = scmp.ne.s32.totalorder %s48, %s51
      %p57 = scmp.eq.s32.totalorder %s12, 0
      %p58 = por %p56, %p57
      %p59 = scmp.ne.s32.totalorder %s48, %s51
      %p60 = scmp.eq.s32.totalorder %s17, 1
      %p61 = por %p59, %p60
      %p62 = scmp.ne.s32.totalorder %s51, %s52
      %p63 = scmp.eq.s32.totalorder %s17, 0
      %p64 = por %p62, %p63
      %p65 = scmp.ne.s32.totalorder %s51, %s52
      %p66 = scmp.eq.s32.totalorder %s18, 1
      %p67 = por %p65, %p66
      %p69 = scmp.ne.s32.totalorder %s52, %s68
      %p70 = scmp.eq.s32.totalorder %s18, 0
      %p71 = por %p69, %p70
      %s73 = sadd.s32 %s72, 1
      %p76 = scmp.eq.s32.totalorder %s12, 1
      %p77 = scmp.ne.s32.totalorder %s72, %s74
      %p78 = scmp.eq.s32.totalorder %s12, 0
      %p79 = por %p77, %p78
      %p80 = scmp.ne.s32.totalorder %s72, %s74
      %p81 = scmp.eq.s32.totalorder %s17, 1
      %p82 = por %p80, %p81
      %p83 = scmp.ne.s32.totalorder %s74, %s75
      %p84 = scmp.eq.s32.totalorder %s17, 0
      %p85 = por %p83, %p84
      %p86 = scmp.ne.s32.totalorder %s74, %s75
      %p87 = scmp.eq.s32.totalorder %s18, 1
      %p88 = por %p86, %p87
      %p90 = scmp.ne.s32.totalorder %s75, %s89
      %p91 = scmp.eq.s32.totalorder %s18, 0
      %p92 = por %p90, %p91
      %s93 = ssub.s32 %s12, %s19
      %p94 = scmp.eq.s32.totalorder %s93, 0
      %s96 = sadd.s32 %s95, 1
      %s97 = scalar_select %p94, %s95, %s96
      %p100 = pneg %p94
      %p101 = scmp.eq.s32.totalorder %s12, 1
      %p102 = por %p100, %p101
      %p103 = scmp.ne.s32.totalorder %s95, %s98
      %p104 = scmp.eq.s32.totalorder %s12, 0
      %p105 = por %p103, %p104
      %p106 = scmp.ne.s32.totalorder %s95, %s98
      %p107 = scmp.eq.s32.totalorder %s17, 1
      %p108 = por %p106, %p107
      %p109 = scmp.ne.s32.totalorder %s98, %s99
      %p110 = scmp.eq.s32.totalorder %s17, 0
      %p111 = por %p109, %p110
      %p112 = scmp.ne.s32.totalorder %s98, %s99
      %p113 = scmp.eq.s32.totalorder %s18, 1
      %p114 = por %p112, %p113
      %p116 = scmp.ne.s32.totalorder %s99, %s115
      %p117 = scmp.eq.s32.totalorder %s18, 0
      %p118 = por %p116, %p117
      %p119 = scmp.le.s32.totalorder 1, %s12
      %p120 = scmp.lt.s32.totalorder %s12, 3
      %p121 = pnand %p119, %p120
      %p122 = pneg %p121
      // Predicated region
      $region9: #{tpu_custom_call.1} parent=5 // pred_check
        _
      $region10: #{tpu_custom_call.1} parent=5 // pred_check_branch
        %124 = sbr.rel (%p121) target = $region12
      $region11: #{tpu_custom_call.1} parent=5 // pred_region
        %s125 = ssub.s32 %s12, 1
        // Predicated region
        $region13: #{tpu_custom_call.1} parent=11 // pred_check
          %p126 = pneg %p85
        $region14: #{tpu_custom_call.1} parent=11 // pred_check_branch
          %128 = sbr.rel (%p126) target = $region16
        $region15: #{tpu_custom_call.1} parent=11 // pred_region
          _
        $region16: #{tpu_custom_call.1} parent=11 // pred_fallthru
          _
      $region12: #{tpu_custom_call.1} parent=5 // pred_fallthru
        _
      %p129 = scmp.lt.s32.totalorder %s12, 2
      // Predicated region
      $region17: #{tpu_custom_call.1} parent=5 // pred_check
        %p130 = pneg %p129
      $region18: #{tpu_custom_call.1} parent=5 // pred_check_branch
        %132 = sbr.rel (%p130) target = $region20
      $region19: #{tpu_custom_call.1} parent=5 // pred_region
        // Predicated region
        $region21: #{tpu_custom_call.1} parent=19 // pred_check
          %p133 = pneg %p32
        $region22: #{tpu_custom_call.1} parent=19 // pred_check_branch
          %135 = sbr.rel (%p133) target = $region24
        $region23: #{tpu_custom_call.1} parent=19 // pred_region
          %s136 = smul.u32 2, %s12
          %p137 = scmp.lt.s32.totalorder %s136, 3
          %s138 = scalar_select %p137, %s136, 3
          %s139 = smul.addr %s138, 4
          %s140 = scalar_lea.vmem %s0, %s139
          %s141 = smul.u32 2, %s12
        $region24: #{tpu_custom_call.1} parent=19 // pred_fallthru
          _
        // Predicated region
        $region25: #{tpu_custom_call.1} parent=19 // pred_check
          %p142 = pneg %p58
        $region26: #{tpu_custom_call.1} parent=19 // pred_check_branch
          %144 = sbr.rel (%p142) target = $region28
        $region27: #{tpu_custom_call.1} parent=19 // pred_region
          %p145 = scmp.lt.s32.totalorder %s12, 1
          %s146 = scalar_select %p145, %s12, 1
          %s147 = smul.addr %s146, 2
          %s148 = smul.addr %s147, 4
          %s149 = scalar_lea.vmem %s1, %s148
        $region28: #{tpu_custom_call.1} parent=19 // pred_fallthru
          _
      $region20: #{tpu_custom_call.1} parent=5 // pred_fallthru
        _
      %p150 = scmp.le.s32.totalorder 1, %s12
      %p151 = scmp.lt.s32.totalorder %s12, 3
      %p152 = pnand %p150, %p151
      %p153 = pneg %p152
      // Predicated region
      $region29: #{tpu_custom_call.1} parent=5 // pred_check
        _
      $region30: #{tpu_custom_call.1} parent=5 // pred_check_branch
        %155 = sbr.rel (%p152) target = $region32
      $region31: #{tpu_custom_call.1} parent=5 // pred_region
        %s156 = ssub.s32 %s12, 1
        %s157 = smul.u32 2, %s17
        %p158 = scmp.lt.s32.totalorder %s157, 3
        %s159 = scalar_select %p158, %s157, 3
        %s160 = smul.addr %s159, 4
        %s161 = scalar_lea.vmem %s0, %s160
        %p162 = pneg %p38
        %p163 = pneg %p35
        %p164 = scmp.lt.s32.totalorder %s17, 1
        %s165 = scalar_select %p164, %s17, 1
        %s166 = smul.addr %s165, 2
        %s167 = smul.addr %s166, 4
        %s168 = scalar_lea.vmem %s1, %s167
        %p169 = pneg %p64
        %p170 = pneg %p61
        %p171 = pneg %p85
        %p172 = pneg %p82
        %p173 = pneg %p111
        %p174 = pneg %p108
        %s175 = sand.u32 %s98, 1
        %s176 = scalar_lea.sflag [#allocation3], %s175
        %s177 = sand.u32 %s98, 1
        %s178 = smul.addr %s177, 128
        %s179 = scalar_lea.vmem [#allocation2], %s178
        %s180 = smul.u32 2, %s17
        %p181 = scmp.lt.s32.totalorder %s180, 3
        %s182 = scalar_select %p181, %s180, 3
        %s183 = smul.addr %s182, 4
        %s184 = scalar_lea.vmem %s0, %s183
        %s185 = smul.u32 2, %s17
        %p186 = scmp.lt.s32.totalorder %s17, 1
        %s187 = scalar_select %p186, %s17, 1
        %s188 = smul.addr %s187, 2
        %s189 = smul.addr %s188, 4
        %s190 = scalar_lea.vmem %s1, %s189
        %s191 = smul.u32 2, %s17
        %v193 = vld [vmem:[%s2] sm:$0xf]
        %v194 = vld [vmem:[%s2 + $0x4] sm:$0xf]
        %v195 = vld [vmem:[%s2 + $0x8] sm:$0xf]
        %v196 = vld [vmem:[%s2 + $0xc] sm:$0xf]
        %v197 = vld [vmem:[%s2 + $0x10] sm:$0xf]
        %v198 = vld [vmem:[%s2 + $0x14] sm:$0xf]
        %v199 = vld [vmem:[%s2 + $0x18] sm:$0xf]
        %v200 = vld [vmem:[%s2 + $0x1c] sm:$0xf]
        %v201 = vld [vmem:[%s2 + $0x20] sm:$0xf]
        %v202 = vld [vmem:[%s2 + $0x24] sm:$0xf]
        %v203 = vld [vmem:[%s2 + $0x28] sm:$0xf]
        %v204 = vld [vmem:[%s2 + $0x2c] sm:$0xf]
        %v205 = vld [vmem:[%s2 + $0x30] sm:$0xf]
        %v206 = vld [vmem:[%s2 + $0x34] sm:$0xf]
        %v207 = vld [vmem:[%s2 + $0x38] sm:$0xf]
        %v208 = vld [vmem:[%s2 + $0x3c] sm:$0xf]
        %v209 = vld [vmem:[%s190] sm:$0xf]
        %v210 = vld [vmem:[%s190 + $0x4] sm:$0xf]
        %v227 = vunpack.c.l.b16 %v193
        %v228 = vunpack.c.l.b16 %v194
        %v229 = vunpack.c.l.b16 %v195
        %v230 = vunpack.c.l.b16 %v196
        %v231 = vunpack.c.l.b16 %v197
        %v232 = vunpack.c.l.b16 %v198
        %v233 = vunpack.c.l.b16 %v199
        %v234 = vunpack.c.l.b16 %v200
        %v235 = vunpack.c.l.b16 %v201
        %v236 = vunpack.c.l.b16 %v202
        %v237 = vunpack.c.l.b16 %v203
        %v238 = vunpack.c.l.b16 %v204
        %v239 = vunpack.c.l.b16 %v205
        %v240 = vunpack.c.l.b16 %v206
        %v241 = vunpack.c.l.b16 %v207
        %v242 = vunpack.c.l.b16 %v208
        %v243 = vpack.c.b16 %v228, %v227
        %v244 = vpack.c.b16 %v230, %v229
        %v245 = vpack.c.b16 %v232, %v231
        %v246 = vpack.c.b16 %v234, %v233
        %v247 = vpack.c.b16 %v236, %v235
        %v248 = vpack.c.b16 %v238, %v237
        %v249 = vpack.c.b16 %v240, %v239
        %v250 = vpack.c.b16 %v242, %v241
        %v253 = vunpack.c.l.b16 %v209
        %v254 = vunpack.c.l.b16 %v210
        %v255 = vpack.c.b16 %v254, %v253
        %vm257 = vcmask 130048
        %v259 = vsel %vm257, %v243, 0
        %v262 = vsel %vm257, %v244, 0
        %v265 = vsel %vm257, %v245, 0
        %v268 = vsel %vm257, %v246, 0
        %v271 = vsel %vm257, %v247, 0
        %v274 = vsel %vm257, %v248, 0
        %v277 = vsel %vm257, %v249, 0
        %v280 = vsel %vm257, %v250, 0
        %282 = vmatprep.subr.bf16.mxu0 0
        %283 = vmatpush1.bf16.msra.mxu0 0
        %284 = vmatprep.subr.bf16.mxu0 0
        %285 = vmatpush1.bf16.msra.mxu0 0
        %286 = vmatprep.subr.bf16.mxu0 0
        %287 = vmatpush1.bf16.msra.mxu0 0
        %288 = vmatprep.subr.bf16.mxu0 0
        %289 = vmatpush1.bf16.msra.mxu0 0
        %290 = vmatprep.subr.bf16.mxu0 0
        %291 = vmatpush1.bf16.msra.mxu0 0
        %292 = vmatprep.subr.bf16.mxu0 0
        %293 = vmatpush1.bf16.msra.mxu0 0
        %294 = vmatprep.subr.bf16.mxu0 0
        %295 = vmatpush1.bf16.msra.mxu0 0
        %296 = vmatprep.subr.bf16.mxu0 0
        %297 = vmatpush1.bf16.msra.mxu0 %v255
        %298 = vmatprep.subr.bf16.mxu0 0
        %299 = vmatpush2.bf16.msra.mxu0 0
        %300 = vmatprep.subr.bf16.mxu0 0
        %301 = vmatpush2.bf16.msra.mxu0 0
        %302 = vmatprep.subr.bf16.mxu0 0
        %303 = vmatpush2.bf16.msra.mxu0 0
        %304 = vmatprep.subr.bf16.mxu0 0
        %305 = vmatpush2.bf16.msra.mxu0 0
        %306 = vmatprep.subr.bf16.mxu0 0
        %307 = vmatpush2.bf16.msra.mxu0 0
        %308 = vmatprep.subr.bf16.mxu0 0
        %309 = vmatpush2.bf16.msra.mxu0 0
        %310 = vmatprep.subr.bf16.mxu0 0
        %311 = vmatpush2.bf16.msra.mxu0 0
        %312 = vmatprep.subr.bf16.mxu0 0
        %313 = vmatpush2.bf16.msra.mxu0 0
        %314 = vmatprep.mubr.bf16.mxu0 0
        %315 = vmatmul.mubr.bf16.gmra.mxu0 %v259
        %v316 = vpop.f32.mrf.mxu0
        %v317 = vadd.f32 0.0, %v316
        %v318 = vpop.f32.mrf.mxu0
        %v319 = vpop.f32.mrf.mxu0
        %v320 = vadd.f32 0.0, %v319
        %v321 = vpop.f32.mrf.mxu0
        %322 = vmatprep.mubr.bf16.mxu0 0
        %323 = vmatmul.mubr.bf16.gmra.mxu0 %v262
        %v324 = vpop.f32.mrf.mxu0
        %v325 = vadd.f32 0.0, %v324
        %v326 = vpop.f32.mrf.mxu0
        %v327 = vpop.f32.mrf.mxu0
        %v328 = vadd.f32 0.0, %v327
        %v329 = vpop.f32.mrf.mxu0
        %330 = vmatprep.mubr.bf16.mxu0 0
        %331 = vmatmul.mubr.bf16.gmra.mxu0 %v265
        %v332 = vpop.f32.mrf.mxu0
        %v333 = vadd.f32 0.0, %v332
        %v334 = vpop.f32.mrf.mxu0
        %v335 = vpop.f32.mrf.mxu0
        %v336 = vadd.f32 0.0, %v335
        %v337 = vpop.f32.mrf.mxu0
        %338 = vmatprep.mubr.bf16.mxu0 0
        %339 = vmatmul.mubr.bf16.gmra.mxu0 %v268
        %v340 = vpop.f32.mrf.mxu0
        %v341 = vadd.f32 0.0, %v340
        %v342 = vpop.f32.mrf.mxu0
        %v343 = vpop.f32.mrf.mxu0
        %v344 = vadd.f32 0.0, %v343
        %v345 = vpop.f32.mrf.mxu0
        %346 = vmatprep.mubr.bf16.mxu0 0
        %347 = vmatmul.mubr.bf16.gmra.mxu0 %v271
        %v348 = vpop.f32.mrf.mxu0
        %v349 = vadd.f32 0.0, %v348
        %v350 = vpop.f32.mrf.mxu0
        %v351 = vpop.f32.mrf.mxu0
        %v352 = vadd.f32 0.0, %v351
        %v353 = vpop.f32.mrf.mxu0
        %354 = vmatprep.mubr.bf16.mxu0 0
        %355 = vmatmul.mubr.bf16.gmra.mxu0 %v274
        %v356 = vpop.f32.mrf.mxu0
        %v357 = vadd.f32 0.0, %v356
        %v358 = vpop.f32.mrf.mxu0
        %v359 = vpop.f32.mrf.mxu0
        %v360 = vadd.f32 0.0, %v359
        %v361 = vpop.f32.mrf.mxu0
        %362 = vmatprep.mubr.bf16.mxu0 0
        %363 = vmatmul.mubr.bf16.gmra.mxu0 %v277
        %v364 = vpop.f32.mrf.mxu0
        %v365 = vadd.f32 0.0, %v364
        %v366 = vpop.f32.mrf.mxu0
        %v367 = vpop.f32.mrf.mxu0
        %v368 = vadd.f32 0.0, %v367
        %v369 = vpop.f32.mrf.mxu0
        %370 = vmatprep.mubr.bf16.mxu0 0
        %371 = vmatmul.mubr.bf16.gmra.mxu0 %v280
        %v372 = vpop.f32.mrf.mxu0
        %v373 = vadd.f32 0.0, %v372
        %v374 = vpop.f32.mrf.mxu0
        %v375 = vpop.f32.mrf.mxu0
        %v376 = vadd.f32 0.0, %v375
        %v377 = vpop.f32.mrf.mxu0
        %378 = vdwg.mxu0
        %v379 = vpack.c.bf16 %v320, %v317
        %v380 = vpack.c.bf16 %v328, %v325
        %v381 = vpack.c.bf16 %v336, %v333
        %v382 = vpack.c.bf16 %v344, %v341
        %v383 = vpack.c.bf16 %v352, %v349
        %v384 = vpack.c.bf16 %v360, %v357
        %v385 = vpack.c.bf16 %v368, %v365
        %v386 = vpack.c.bf16 %v376, %v373
        %v387 = vld [vmem:[%s184] sm:$0xf]
        %v389 = vsel %vm257, %v387, 0
        %391 = vmatprep.subr.bf16.mxu0 0
        %392 = vmatpush1.bf16.msra.mxu0 0
        %393 = vmatprep.subr.bf16.mxu0 0
        %394 = vmatpush1.bf16.msra.mxu0 0
        %395 = vmatprep.subr.bf16.mxu0 0
        %396 = vmatpush1.bf16.msra.mxu0 0
        %397 = vmatprep.subr.bf16.mxu0 0
        %398 = vmatpush1.bf16.msra.mxu0 0
        %399 = vmatprep.subr.bf16.mxu0 0
        %400 = vmatpush1.bf16.msra.mxu0 0
        %401 = vmatprep.subr.bf16.mxu0 0
        %402 = vmatpush1.bf16.msra.mxu0 0
        %403 = vmatprep.subr.bf16.mxu0 0
        %404 = vmatpush1.bf16.msra.mxu0 0
        %405 = vmatprep.subr.bf16.mxu0 0
        %406 = vmatpush1.bf16.msra.mxu0 %v379
        %407 = vmatprep.subr.bf16.mxu0 0
        %408 = vmatpush2.bf16.msra.mxu0 0
        %409 = vmatprep.subr.bf16.mxu0 0
        %410 = vmatpush2.bf16.msra.mxu0 0
        %411 = vmatprep.subr.bf16.mxu0 0
        %412 = vmatpush2.bf16.msra.mxu0 0
        %413 = vmatprep.subr.bf16.mxu0 0
        %414 = vmatpush2.bf16.msra.mxu0 0
        %415 = vmatprep.subr.bf16.mxu0 0
        %416 = vmatpush2.bf16.msra.mxu0 0
        %417 = vmatprep.subr.bf16.mxu0 0
        %418 = vmatpush2.bf16.msra.mxu0 0
        %419 = vmatprep.subr.bf16.mxu0 0
        %420 = vmatpush2.bf16.msra.mxu0 0
        %421 = vmatprep.subr.bf16.mxu0 0
        %422 = vmatpush2.bf16.msra.mxu0 0
        %423 = vmatprep.mubr.bf16.mxu0 0
        %424 = vmatmul.mubr.bf16.gmra.mxu0 %v389
        %v425 = vpop.f32.mrf.mxu0
        %v426 = vadd.f32 0.0, %v425
        %v427 = vpop.f32.mrf.mxu0
        %v428 = vpop.f32.mrf.mxu0
        %v429 = vpop.f32.mrf.mxu0
        %430 = vdwg.mxu0
        %431 = vmatprep.subr.bf16.mxu0 0
        %432 = vmatpush1.bf16.msra.mxu0 0
        %433 = vmatprep.subr.bf16.mxu0 0
        %434 = vmatpush1.bf16.msra.mxu0 0
        %435 = vmatprep.subr.bf16.mxu0 0
        %436 = vmatpush1.bf16.msra.mxu0 0
        %437 = vmatprep.subr.bf16.mxu0 0
        %438 = vmatpush1.bf16.msra.mxu0 0
        %439 = vmatprep.subr.bf16.mxu0 0
        %440 = vmatpush1.bf16.msra.mxu0 0
        %441 = vmatprep.subr.bf16.mxu0 0
        %442 = vmatpush1.bf16.msra.mxu0 0
        %443 = vmatprep.subr.bf16.mxu0 0
        %444 = vmatpush1.bf16.msra.mxu0 0
        %445 = vmatprep.subr.bf16.mxu0 0
        %446 = vmatpush1.bf16.msra.mxu0 %v380
        %447 = vmatprep.subr.bf16.mxu0 0
        %448 = vmatpush2.bf16.msra.mxu0 0
        %449 = vmatprep.subr.bf16.mxu0 0
        %450 = vmatpush2.bf16.msra.mxu0 0
        %451 = vmatprep.subr.bf16.mxu0 0
        %452 = vmatpush2.bf16.msra.mxu0 0
        %453 = vmatprep.subr.bf16.mxu0 0
        %454 = vmatpush2.bf16.msra.mxu0 0
        %455 = vmatprep.subr.bf16.mxu0 0
        %456 = vmatpush2.bf16.msra.mxu0 0
        %457 = vmatprep.subr.bf16.mxu0 0
        %458 = vmatpush2.bf16.msra.mxu0 0
        %459 = vmatprep.subr.bf16.mxu0 0
        %460 = vmatpush2.bf16.msra.mxu0 0
        %461 = vmatprep.subr.bf16.mxu0 0
        %462 = vmatpush2.bf16.msra.mxu0 0
        %463 = vmatprep.mubr.bf16.mxu0 0
        %464 = vmatmul.mubr.bf16.gmra.mxu0 %v389
        %v465 = vpop.f32.mrf.mxu0
        %v466 = vadd.f32 0.0, %v465
        %v467 = vpop.f32.mrf.mxu0
        %v468 = vpop.f32.mrf.mxu0
        %v469 = vpop.f32.mrf.mxu0
        %470 = vdwg.mxu0
        %471 = vmatprep.subr.bf16.mxu0 0
        %472 = vmatpush1.bf16.msra.mxu0 0
        %473 = vmatprep.subr.bf16.mxu0 0
        %474 = vmatpush1.bf16.msra.mxu0 0
        %475 = vmatprep.subr.bf16.mxu0 0
        %476 = vmatpush1.bf16.msra.mxu0 0
        %477 = vmatprep.subr.bf16.mxu0 0
        %478 = vmatpush1.bf16.msra.mxu0 0
        %479 = vmatprep.subr.bf16.mxu0 0
        %480 = vmatpush1.bf16.msra.mxu0 0
        %481 = vmatprep.subr.bf16.mxu0 0
        %482 = vmatpush1.bf16.msra.mxu0 0
        %483 = vmatprep.subr.bf16.mxu0 0
        %484 = vmatpush1.bf16.msra.mxu0 0
        %485 = vmatprep.subr.bf16.mxu0 0
        %486 = vmatpush1.bf16.msra.mxu0 %v381
        %487 = vmatprep.subr.bf16.mxu0 0
        %488 = vmatpush2.bf16.msra.mxu0 0
        %489 = vmatprep.subr.bf16.mxu0 0
        %490 = vmatpush2.bf16.msra.mxu0 0
        %491 = vmatprep.subr.bf16.mxu0 0
        %492 = vmatpush2.bf16.msra.mxu0 0
        %493 = vmatprep.subr.bf16.mxu0 0
        %494 = vmatpush2.bf16.msra.mxu0 0
        %495 = vmatprep.subr.bf16.mxu0 0
        %496 = vmatpush2.bf16.msra.mxu0 0
        %497 = vmatprep.subr.bf16.mxu0 0
        %498 = vmatpush2.bf16.msra.mxu0 0
        %499 = vmatprep.subr.bf16.mxu0 0
        %500 = vmatpush2.bf16.msra.mxu0 0
        %501 = vmatprep.subr.bf16.mxu0 0
        %502 = vmatpush2.bf16.msra.mxu0 0
        %503 = vmatprep.mubr.bf16.mxu0 0
        %504 = vmatmul.mubr.bf16.gmra.mxu0 %v389
        %v505 = vpop.f32.mrf.mxu0
        %v506 = vadd.f32 0.0, %v505
        %v507 = vpop.f32.mrf.mxu0
        %v508 = vpop.f32.mrf.mxu0
        %v509 = vpop.f32.mrf.mxu0
        %510 = vdwg.mxu0
        %511 = vmatprep.subr.bf16.mxu0 0
        %512 = vmatpush1.bf16.msra.mxu0 0
        %513 = vmatprep.subr.bf16.mxu0 0
        %514 = vmatpush1.bf16.msra.mxu0 0
        %515 = vmatprep.subr.bf16.mxu0 0
        %516 = vmatpush1.bf16.msra.mxu0 0
        %517 = vmatprep.subr.bf16.mxu0 0
        %518 = vmatpush1.bf16.msra.mxu0 0
        %519 = vmatprep.subr.bf16.mxu0 0
        %520 = vmatpush1.bf16.msra.mxu0 0
        %521 = vmatprep.subr.bf16.mxu0 0
        %522 = vmatpush1.bf16.msra.mxu0 0
        %523 = vmatprep.subr.bf16.mxu0 0
        %524 = vmatpush1.bf16.msra.mxu0 0
        %525 = vmatprep.subr.bf16.mxu0 0
        %526 = vmatpush1.bf16.msra.mxu0 %v382
        %527 = vmatprep.subr.bf16.mxu0 0
        %528 = vmatpush2.bf16.msra.mxu0 0
        %529 = vmatprep.subr.bf16.mxu0 0
        %530 = vmatpush2.bf16.msra.mxu0 0
        %531 = vmatprep.subr.bf16.mxu0 0
        %532 = vmatpush2.bf16.msra.mxu0 0
        %533 = vmatprep.subr.bf16.mxu0 0
        %534 = vmatpush2.bf16.msra.mxu0 0
        %535 = vmatprep.subr.bf16.mxu0 0
        %536 = vmatpush2.bf16.msra.mxu0 0
        %537 = vmatprep.subr.bf16.mxu0 0
        %538 = vmatpush2.bf16.msra.mxu0 0
        %539 = vmatprep.subr.bf16.mxu0 0
        %540 = vmatpush2.bf16.msra.mxu0 0
        %541 = vmatprep.subr.bf16.mxu0 0
        %542 = vmatpush2.bf16.msra.mxu0 0
        %543 = vmatprep.mubr.bf16.mxu0 0
        %544 = vmatmul.mubr.bf16.gmra.mxu0 %v389
        %v545 = vpop.f32.mrf.mxu0
        %v546 = vadd.f32 0.0, %v545
        %v547 = vpop.f32.mrf.mxu0
        %v548 = vpop.f32.mrf.mxu0
        %v549 = vpop.f32.mrf.mxu0
        %550 = vdwg.mxu0
        %551 = vmatprep.subr.bf16.mxu0 0
        %552 = vmatpush1.bf16.msra.mxu0 0
        %553 = vmatprep.subr.bf16.mxu0 0
        %554 = vmatpush1.bf16.msra.mxu0 0
        %555 = vmatprep.subr.bf16.mxu0 0
        %556 = vmatpush1.bf16.msra.mxu0 0
        %557 = vmatprep.subr.bf16.mxu0 0
        %558 = vmatpush1.bf16.msra.mxu0 0
        %559 = vmatprep.subr.bf16.mxu0 0
        %560 = vmatpush1.bf16.msra.mxu0 0
        %561 = vmatprep.subr.bf16.mxu0 0
        %562 = vmatpush1.bf16.msra.mxu0 0
        %563 = vmatprep.subr.bf16.mxu0 0
        %564 = vmatpush1.bf16.msra.mxu0 0
        %565 = vmatprep.subr.bf16.mxu0 0
        %566 = vmatpush1.bf16.msra.mxu0 %v383
        %567 = vmatprep.subr.bf16.mxu0 0
        %568 = vmatpush2.bf16.msra.mxu0 0
        %569 = vmatprep.subr.bf16.mxu0 0
        %570 = vmatpush2.bf16.msra.mxu0 0
        %571 = vmatprep.subr.bf16.mxu0 0
        %572 = vmatpush2.bf16.msra.mxu0 0
        %573 = vmatprep.subr.bf16.mxu0 0
        %574 = vmatpush2.bf16.msra.mxu0 0
        %575 = vmatprep.subr.bf16.mxu0 0
        %576 = vmatpush2.bf16.msra.mxu0 0
        %577 = vmatprep.subr.bf16.mxu0 0
        %578 = vmatpush2.bf16.msra.mxu0 0
        %579 = vmatprep.subr.bf16.mxu0 0
        %580 = vmatpush2.bf16.msra.mxu0 0
        %581 = vmatprep.subr.bf16.mxu0 0
        %582 = vmatpush2.bf16.msra.mxu0 0
        %583 = vmatprep.mubr.bf16.mxu0 0
        %584 = vmatmul.mubr.bf16.gmra.mxu0 %v389
        %v585 = vpop.f32.mrf.mxu0
        %v586 = vadd.f32 0.0, %v585
        %v587 = vpop.f32.mrf.mxu0
        %v588 = vpop.f32.mrf.mxu0
        %v589 = vpop.f32.mrf.mxu0
        %590 = vdwg.mxu0
        %591 = vmatprep.subr.bf16.mxu0 0
        %592 = vmatpush1.bf16.msra.mxu0 0
        %593 = vmatprep.subr.bf16.mxu0 0
        %594 = vmatpush1.bf16.msra.mxu0 0
        %595 = vmatprep.subr.bf16.mxu0 0
        %596 = vmatpush1.bf16.msra.mxu0 0
        %597 = vmatprep.subr.bf16.mxu0 0
        %598 = vmatpush1.bf16.msra.mxu0 0
        %599 = vmatprep.subr.bf16.mxu0 0
        %600 = vmatpush1.bf16.msra.mxu0 0
        %601 = vmatprep.subr.bf16.mxu0 0
        %602 = vmatpush1.bf16.msra.mxu0 0
        %603 = vmatprep.subr.bf16.mxu0 0
        %604 = vmatpush1.bf16.msra.mxu0 0
        %605 = vmatprep.subr.bf16.mxu0 0
        %606 = vmatpush1.bf16.msra.mxu0 %v384
        %607 = vmatprep.subr.bf16.mxu0 0
        %608 = vmatpush2.bf16.msra.mxu0 0
        %609 = vmatprep.subr.bf16.mxu0 0
        %610 = vmatpush2.bf16.msra.mxu0 0
        %611 = vmatprep.subr.bf16.mxu0 0
        %612 = vmatpush2.bf16.msra.mxu0 0
        %613 = vmatprep.subr.bf16.mxu0 0
        %614 = vmatpush2.bf16.msra.mxu0 0
        %615 = vmatprep.subr.bf16.mxu0 0
        %616 = vmatpush2.bf16.msra.mxu0 0
        %617 = vmatprep.subr.bf16.mxu0 0
        %618 = vmatpush2.bf16.msra.mxu0 0
        %619 = vmatprep.subr.bf16.mxu0 0
        %620 = vmatpush2.bf16.msra.mxu0 0
        %621 = vmatprep.subr.bf16.mxu0 0
        %622 = vmatpush2.bf16.msra.mxu0 0
        %623 = vmatprep.mubr.bf16.mxu0 0
        %624 = vmatmul.mubr.bf16.gmra.mxu0 %v389
        %v625 = vpop.f32.mrf.mxu0
        %v626 = vadd.f32 0.0, %v625
        %v627 = vpop.f32.mrf.mxu0
        %v628 = vpop.f32.mrf.mxu0
        %v629 = vpop.f32.mrf.mxu0
        %630 = vdwg.mxu0
        %631 = vmatprep.subr.bf16.mxu0 0
        %632 = vmatpush1.bf16.msra.mxu0 0
        %633 = vmatprep.subr.bf16.mxu0 0
        %634 = vmatpush1.bf16.msra.mxu0 0
        %635 = vmatprep.subr.bf16.mxu0 0
        %636 = vmatpush1.bf16.msra.mxu0 0
        %637 = vmatprep.subr.bf16.mxu0 0
        %638 = vmatpush1.bf16.msra.mxu0 0
        %639 = vmatprep.subr.bf16.mxu0 0
        %640 = vmatpush1.bf16.msra.mxu0 0
        %641 = vmatprep.subr.bf16.mxu0 0
        %642 = vmatpush1.bf16.msra.mxu0 0
        %643 = vmatprep.subr.bf16.mxu0 0
        %644 = vmatpush1.bf16.msra.mxu0 0
        %645 = vmatprep.subr.bf16.mxu0 0
        %646 = vmatpush1.bf16.msra.mxu0 %v385
        %647 = vmatprep.subr.bf16.mxu0 0
        %648 = vmatpush2.bf16.msra.mxu0 0
        %649 = vmatprep.subr.bf16.mxu0 0
        %650 = vmatpush2.bf16.msra.mxu0 0
        %651 = vmatprep.subr.bf16.mxu0 0
        %652 = vmatpush2.bf16.msra.mxu0 0
        %653 = vmatprep.subr.bf16.mxu0 0
        %654 = vmatpush2.bf16.msra.mxu0 0
        %655 = vmatprep.subr.bf16.mxu0 0
        %656 = vmatpush2.bf16.msra.mxu0 0
        %657 = vmatprep.subr.bf16.mxu0 0
        %658 = vmatpush2.bf16.msra.mxu0 0
        %659 = vmatprep.subr.bf16.mxu0 0
        %660 = vmatpush2.bf16.msra.mxu0 0
        %661 = vmatprep.subr.bf16.mxu0 0
        %662 = vmatpush2.bf16.msra.mxu0 0
        %663 = vmatprep.mubr.bf16.mxu0 0
        %664 = vmatmul.mubr.bf16.gmra.mxu0 %v389
        %v665 = vpop.f32.mrf.mxu0
        %v666 = vadd.f32 0.0, %v665
        %v667 = vpop.f32.mrf.mxu0
        %v668 = vpop.f32.mrf.mxu0
        %v669 = vpop.f32.mrf.mxu0
        %670 = vdwg.mxu0
        %671 = vmatprep.subr.bf16.mxu0 0
        %672 = vmatpush1.bf16.msra.mxu0 0
        %673 = vmatprep.subr.bf16.mxu0 0
        %674 = vmatpush1.bf16.msra.mxu0 0
        %675 = vmatprep.subr.bf16.mxu0 0
        %676 = vmatpush1.bf16.msra.mxu0 0
        %677 = vmatprep.subr.bf16.mxu0 0
        %678 = vmatpush1.bf16.msra.mxu0 0
        %679 = vmatprep.subr.bf16.mxu0 0
        %680 = vmatpush1.bf16.msra.mxu0 0
        %681 = vmatprep.subr.bf16.mxu0 0
        %682 = vmatpush1.bf16.msra.mxu0 0
        %683 = vmatprep.subr.bf16.mxu0 0
        %684 = vmatpush1.bf16.msra.mxu0 0
        %685 = vmatprep.subr.bf16.mxu0 0
        %686 = vmatpush1.bf16.msra.mxu0 %v386
        %687 = vmatprep.subr.bf16.mxu0 0
        %688 = vmatpush2.bf16.msra.mxu0 0
        %689 = vmatprep.subr.bf16.mxu0 0
        %690 = vmatpush2.bf16.msra.mxu0 0
        %691 = vmatprep.subr.bf16.mxu0 0
        %692 = vmatpush2.bf16.msra.mxu0 0
        %693 = vmatprep.subr.bf16.mxu0 0
        %694 = vmatpush2.bf16.msra.mxu0 0
        %695 = vmatprep.subr.bf16.mxu0 0
        %696 = vmatpush2.bf16.msra.mxu0 0
        %697 = vmatprep.subr.bf16.mxu0 0
        %698 = vmatpush2.bf16.msra.mxu0 0
        %699 = vmatprep.subr.bf16.mxu0 0
        %700 = vmatpush2.bf16.msra.mxu0 0
        %701 = vmatprep.subr.bf16.mxu0 0
        %702 = vmatpush2.bf16.msra.mxu0 0
        %703 = vmatprep.mubr.bf16.mxu0 0
        %704 = vmatmul.mubr.bf16.gmra.mxu0 %v389
        %v705 = vpop.f32.mrf.mxu0
        %v706 = vadd.f32 0.0, %v705
        %v707 = vpop.f32.mrf.mxu0
        %v708 = vpop.f32.mrf.mxu0
        %v709 = vpop.f32.mrf.mxu0
        %710 = vdwg.mxu0
        %vm711 = vcmask 64512
        %712 = vst.msk [vmem:[%s179] sm:$0xff] %vm711, %v426
        %713 = vst.msk [vmem:[%s179 + $0x8] sm:$0xff] %vm711, %v466
        %714 = vst.msk [vmem:[%s179 + $0x10] sm:$0xff] %vm711, %v506
        %715 = vst.msk [vmem:[%s179 + $0x18] sm:$0xff] %vm711, %v546
        %716 = vst.msk [vmem:[%s179 + $0x20] sm:$0xff] %vm711, %v586
        %717 = vst.msk [vmem:[%s179 + $0x28] sm:$0xff] %vm711, %v626
        %718 = vst.msk [vmem:[%s179 + $0x30] sm:$0xff] %vm711, %v666
        %719 = vst.msk [vmem:[%s179 + $0x38] sm:$0xff] %vm711, %v706
        %s720 = scalar_lea.vmem %s184, 4
        %v721 = vld [vmem:[%s720] sm:$0xf]
        %723 = vrot.lane.b32.xlu0 %v379, 120
        %v724 = vpop.permute.xlu0 %723
        %v727 = vsel %vm257, %v721, 0
        %729 = vmatprep.subr.bf16.mxu0 0
        %730 = vmatpush1.bf16.msra.mxu0 0
        %731 = vmatprep.subr.bf16.mxu0 0
        %732 = vmatpush1.bf16.msra.mxu0 0
        %733 = vmatprep.subr.bf16.mxu0 0
        %734 = vmatpush1.bf16.msra.mxu0 0
        %735 = vmatprep.subr.bf16.mxu0 0
        %736 = vmatpush1.bf16.msra.mxu0 0
        %737 = vmatprep.subr.bf16.mxu0 0
        %738 = vmatpush1.bf16.msra.mxu0 0
        %739 = vmatprep.subr.bf16.mxu0 0
        %740 = vmatpush1.bf16.msra.mxu0 0
        %741 = vmatprep.subr.bf16.mxu0 0
        %742 = vmatpush1.bf16.msra.mxu0 0
        %743 = vmatprep.subr.bf16.mxu0 0
        %744 = vmatpush1.bf16.msra.mxu0 %v724
        %745 = vmatprep.subr.bf16.mxu0 0
        %746 = vmatpush2.bf16.msra.mxu0 0
        %747 = vmatprep.subr.bf16.mxu0 0
        %748 = vmatpush2.bf16.msra.mxu0 0
        %749 = vmatprep.subr.bf16.mxu0 0
        %750 = vmatpush2.bf16.msra.mxu0 0
        %751 = vmatprep.subr.bf16.mxu0 0
        %752 = vmatpush2.bf16.msra.mxu0 0
        %753 = vmatprep.subr.bf16.mxu0 0
        %754 = vmatpush2.bf16.msra.mxu0 0
        %755 = vmatprep.subr.bf16.mxu0 0
        %756 = vmatpush2.bf16.msra.mxu0 0
        %757 = vmatprep.subr.bf16.mxu0 0
        %758 = vmatpush2.bf16.msra.mxu0 0
        %759 = vmatprep.subr.bf16.mxu0 0
        %760 = vmatpush2.bf16.msra.mxu0 0
        %761 = vmatprep.mubr.bf16.mxu0 0
        %762 = vmatmul.mubr.bf16.gmra.mxu0 %v727
        %v763 = vpop.f32.mrf.mxu0
        %v764 = vadd.f32 0.0, %v763
        %v765 = vpop.f32.mrf.mxu0
        %v766 = vpop.f32.mrf.mxu0
        %v767 = vpop.f32.mrf.mxu0
        %768 = vdwg.mxu0
        %770 = vrot.lane.b32.xlu0 %v380, 120
        %v771 = vpop.permute.xlu0 %770
        %773 = vmatprep.subr.bf16.mxu0 0
        %774 = vmatpush1.bf16.msra.mxu0 0
        %775 = vmatprep.subr.bf16.mxu0 0
        %776 = vmatpush1.bf16.msra.mxu0 0
        %777 = vmatprep.subr.bf16.mxu0 0
        %778 = vmatpush1.bf16.msra.mxu0 0
        %779 = vmatprep.subr.bf16.mxu0 0
        %780 = vmatpush1.bf16.msra.mxu0 0
        %781 = vmatprep.subr.bf16.mxu0 0
        %782 = vmatpush1.bf16.msra.mxu0 0
        %783 = vmatprep.subr.bf16.mxu0 0
        %784 = vmatpush1.bf16.msra.mxu0 0
        %785 = vmatprep.subr.bf16.mxu0 0
        %786 = vmatpush1.bf16.msra.mxu0 0
        %787 = vmatprep.subr.bf16.mxu0 0
        %788 = vmatpush1.bf16.msra.mxu0 %v771
        %789 = vmatprep.subr.bf16.mxu0 0
        %790 = vmatpush2.bf16.msra.mxu0 0
        %791 = vmatprep.subr.bf16.mxu0 0
        %792 = vmatpush2.bf16.msra.mxu0 0
        %793 = vmatprep.subr.bf16.mxu0 0
        %794 = vmatpush2.bf16.msra.mxu0 0
        %795 = vmatprep.subr.bf16.mxu0 0
        %796 = vmatpush2.bf16.msra.mxu0 0
        %797 = vmatprep.subr.bf16.mxu0 0
        %798 = vmatpush2.bf16.msra.mxu0 0
        %799 = vmatprep.subr.bf16.mxu0 0
        %800 = vmatpush2.bf16.msra.mxu0 0
        %801 = vmatprep.subr.bf16.mxu0 0
        %802 = vmatpush2.bf16.msra.mxu0 0
        %803 = vmatprep.subr.bf16.mxu0 0
        %804 = vmatpush2.bf16.msra.mxu0 0
        %805 = vmatprep.mubr.bf16.mxu0 0
        %806 = vmatmul.mubr.bf16.gmra.mxu0 %v727
        %v807 = vpop.f32.mrf.mxu0
        %v808 = vadd.f32 0.0, %v807
        %v809 = vpop.f32.mrf.mxu0
        %v810 = vpop.f32.mrf.mxu0
        %v811 = vpop.f32.mrf.mxu0
        %812 = vdwg.mxu0
        %814 = vrot.lane.b32.xlu0 %v381, 120
        %v815 = vpop.permute.xlu0 %814
        %817 = vmatprep.subr.bf16.mxu0 0
        %818 = vmatpush1.bf16.msra.mxu0 0
        %819 = vmatprep.subr.bf16.mxu0 0
        %820 = vmatpush1.bf16.msra.mxu0 0
        %821 = vmatprep.subr.bf16.mxu0 0
        %822 = vmatpush1.bf16.msra.mxu0 0
        %823 = vmatprep.subr.bf16.mxu0 0
        %824 = vmatpush1.bf16.msra.mxu0 0
        %825 = vmatprep.subr.bf16.mxu0 0
        %826 = vmatpush1.bf16.msra.mxu0 0
        %827 = vmatprep.subr.bf16.mxu0 0
        %828 = vmatpush1.bf16.msra.mxu0 0
        %829 = vmatprep.subr.bf16.mxu0 0
        %830 = vmatpush1.bf16.msra.mxu0 0
        %831 = vmatprep.subr.bf16.mxu0 0
        %832 = vmatpush1.bf16.msra.mxu0 %v815
        %833 = vmatprep.subr.bf16.mxu0 0
        %834 = vmatpush2.bf16.msra.mxu0 0
        %835 = vmatprep.subr.bf16.mxu0 0
        %836 = vmatpush2.bf16.msra.mxu0 0
        %837 = vmatprep.subr.bf16.mxu0 0
        %838 = vmatpush2.bf16.msra.mxu0 0
        %839 = vmatprep.subr.bf16.mxu0 0
        %840 = vmatpush2.bf16.msra.mxu0 0
        %841 = vmatprep.subr.bf16.mxu0 0
        %842 = vmatpush2.bf16.msra.mxu0 0
        %843 = vmatprep.subr.bf16.mxu0 0
        %844 = vmatpush2.bf16.msra.mxu0 0
        %845 = vmatprep.subr.bf16.mxu0 0
        %846 = vmatpush2.bf16.msra.mxu0 0
        %847 = vmatprep.subr.bf16.mxu0 0
        %848 = vmatpush2.bf16.msra.mxu0 0
        %849 = vmatprep.mubr.bf16.mxu0 0
        %850 = vmatmul.mubr.bf16.gmra.mxu0 %v727
        %v851 = vpop.f32.mrf.mxu0
        %v852 = vadd.f32 0.0, %v851
        %v853 = vpop.f32.mrf.mxu0
        %v854 = vpop.f32.mrf.mxu0
        %v855 = vpop.f32.mrf.mxu0
        %856 = vdwg.mxu0
        %858 = vrot.lane.b32.xlu0 %v382, 120
        %v859 = vpop.permute.xlu0 %858
        %861 = vmatprep.subr.bf16.mxu0 0
        %862 = vmatpush1.bf16.msra.mxu0 0
        %863 = vmatprep.subr.bf16.mxu0 0
        %864 = vmatpush1.bf16.msra.mxu0 0
        %865 = vmatprep.subr.bf16.mxu0 0
        %866 = vmatpush1.bf16.msra.mxu0 0
        %867 = vmatprep.subr.bf16.mxu0 0
        %868 = vmatpush1.bf16.msra.mxu0 0
        %869 = vmatprep.subr.bf16.mxu0 0
        %870 = vmatpush1.bf16.msra.mxu0 0
        %871 = vmatprep.subr.bf16.mxu0 0
        %872 = vmatpush1.bf16.msra.mxu0 0
        %873 = vmatprep.subr.bf16.mxu0 0
        %874 = vmatpush1.bf16.msra.mxu0 0
        %875 = vmatprep.subr.bf16.mxu0 0
        %876 = vmatpush1.bf16.msra.mxu0 %v859
        %877 = vmatprep.subr.bf16.mxu0 0
        %878 = vmatpush2.bf16.msra.mxu0 0
        %879 = vmatprep.subr.bf16.mxu0 0
        %880 = vmatpush2.bf16.msra.mxu0 0
        %881 = vmatprep.subr.bf16.mxu0 0
        %882 = vmatpush2.bf16.msra.mxu0 0
        %883 = vmatprep.subr.bf16.mxu0 0
        %884 = vmatpush2.bf16.msra.mxu0 0
        %885 = vmatprep.subr.bf16.mxu0 0
        %886 = vmatpush2.bf16.msra.mxu0 0
        %887 = vmatprep.subr.bf16.mxu0 0
        %888 = vmatpush2.bf16.msra.mxu0 0
        %889 = vmatprep.subr.bf16.mxu0 0
        %890 = vmatpush2.bf16.msra.mxu0 0
        %891 = vmatprep.subr.bf16.mxu0 0
        %892 = vmatpush2.bf16.msra.mxu0 0
        %893 = vmatprep.mubr.bf16.mxu0 0
        %894 = vmatmul.mubr.bf16.gmra.mxu0 %v727
        %v895 = vpop.f32.mrf.mxu0
        %v896 = vadd.f32 0.0, %v895
        %v897 = vpop.f32.mrf.mxu0
        %v898 = vpop.f32.mrf.mxu0
        %v899 = vpop.f32.mrf.mxu0
        %900 = vdwg.mxu0
        %902 = vrot.lane.b32.xlu0 %v383, 120
        %v903 = vpop.permute.xlu0 %902
        %905 = vmatprep.subr.bf16.mxu0 0
        %906 = vmatpush1.bf16.msra.mxu0 0
        %907 = vmatprep.subr.bf16.mxu0 0
        %908 = vmatpush1.bf16.msra.mxu0 0
        %909 = vmatprep.subr.bf16.mxu0 0
        %910 = vmatpush1.bf16.msra.mxu0 0
        %911 = vmatprep.subr.bf16.mxu0 0
        %912 = vmatpush1.bf16.msra.mxu0 0
        %913 = vmatprep.subr.bf16.mxu0 0
        %914 = vmatpush1.bf16.msra.mxu0 0
        %915 = vmatprep.subr.bf16.mxu0 0
        %916 = vmatpush1.bf16.msra.mxu0 0
        %917 = vmatprep.subr.bf16.mxu0 0
        %918 = vmatpush1.bf16.msra.mxu0 0
        %919 = vmatprep.subr.bf16.mxu0 0
        %920 = vmatpush1.bf16.msra.mxu0 %v903
        %921 = vmatprep.subr.bf16.mxu0 0
        %922 = vmatpush2.bf16.msra.mxu0 0
        %923 = vmatprep.subr.bf16.mxu0 0
        %924 = vmatpush2.bf16.msra.mxu0 0
        %925 = vmatprep.subr.bf16.mxu0 0
        %926 = vmatpush2.bf16.msra.mxu0 0
        %927 = vmatprep.subr.bf16.mxu0 0
        %928 = vmatpush2.bf16.msra.mxu0 0
        %929 = vmatprep.subr.bf16.mxu0 0
        %930 = vmatpush2.bf16.msra.mxu0 0
        %931 = vmatprep.subr.bf16.mxu0 0
        %932 = vmatpush2.bf16.msra.mxu0 0
        %933 = vmatprep.subr.bf16.mxu0 0
        %934 = vmatpush2.bf16.msra.mxu0 0
        %935 = vmatprep.subr.bf16.mxu0 0
        %936 = vmatpush2.bf16.msra.mxu0 0
        %937 = vmatprep.mubr.bf16.mxu0 0
        %938 = vmatmul.mubr.bf16.gmra.mxu0 %v727
        %v939 = vpop.f32.mrf.mxu0
        %v940 = vadd.f32 0.0, %v939
        %v941 = vpop.f32.mrf.mxu0
        %v942 = vpop.f32.mrf.mxu0
        %v943 = vpop.f32.mrf.mxu0
        %944 = vdwg.mxu0
        %946 = vrot.lane.b32.xlu0 %v384, 120
        %v947 = vpop.permute.xlu0 %946
        %949 = vmatprep.subr.bf16.mxu0 0
        %950 = vmatpush1.bf16.msra.mxu0 0
        %951 = vmatprep.subr.bf16.mxu0 0
        %952 = vmatpush1.bf16.msra.mxu0 0
        %953 = vmatprep.subr.bf16.mxu0 0
        %954 = vmatpush1.bf16.msra.mxu0 0
        %955 = vmatprep.subr.bf16.mxu0 0
        %956 = vmatpush1.bf16.msra.mxu0 0
        %957 = vmatprep.subr.bf16.mxu0 0
        %958 = vmatpush1.bf16.msra.mxu0 0
        %959 = vmatprep.subr.bf16.mxu0 0
        %960 = vmatpush1.bf16.msra.mxu0 0
        %961 = vmatprep.subr.bf16.mxu0 0
        %962 = vmatpush1.bf16.msra.mxu0 0
        %963 = vmatprep.subr.bf16.mxu0 0
        %964 = vmatpush1.bf16.msra.mxu0 %v947
        %965 = vmatprep.subr.bf16.mxu0 0
        %966 = vmatpush2.bf16.msra.mxu0 0
        %967 = vmatprep.subr.bf16.mxu0 0
        %968 = vmatpush2.bf16.msra.mxu0 0
        %969 = vmatprep.subr.bf16.mxu0 0
        %970 = vmatpush2.bf16.msra.mxu0 0
        %971 = vmatprep.subr.bf16.mxu0 0
        %972 = vmatpush2.bf16.msra.mxu0 0
        %973 = vmatprep.subr.bf16.mxu0 0
        %974 = vmatpush2.bf16.msra.mxu0 0
        %975 = vmatprep.subr.bf16.mxu0 0
        %976 = vmatpush2.bf16.msra.mxu0 0
        %977 = vmatprep.subr.bf16.mxu0 0
        %978 = vmatpush2.bf16.msra.mxu0 0
        %979 = vmatprep.subr.bf16.mxu0 0
        %980 = vmatpush2.bf16.msra.mxu0 0
        %981 = vmatprep.mubr.bf16.mxu0 0
        %982 = vmatmul.mubr.bf16.gmra.mxu0 %v727
        %v983 = vpop.f32.mrf.mxu0
        %v984 = vadd.f32 0.0, %v983
        %v985 = vpop.f32.mrf.mxu0
        %v986 = vpop.f32.mrf.mxu0
        %v987 = vpop.f32.mrf.mxu0
        %988 = vdwg.mxu0
        %990 = vrot.lane.b32.xlu0 %v385, 120
        %v991 = vpop.permute.xlu0 %990
        %993 = vmatprep.subr.bf16.mxu0 0
        %994 = vmatpush1.bf16.msra.mxu0 0
        %995 = vmatprep.subr.bf16.mxu0 0
        %996 = vmatpush1.bf16.msra.mxu0 0
        %997 = vmatprep.subr.bf16.mxu0 0
        %998 = vmatpush1.bf16.msra.mxu0 0
        %999 = vmatprep.subr.bf16.mxu0 0
        %1000 = vmatpush1.bf16.msra.mxu0 0
        %1001 = vmatprep.subr.bf16.mxu0 0
        %1002 = vmatpush1.bf16.msra.mxu0 0
        %1003 = vmatprep.subr.bf16.mxu0 0
        %1004 = vmatpush1.bf16.msra.mxu0 0
        %1005 = vmatprep.subr.bf16.mxu0 0
        %1006 = vmatpush1.bf16.msra.mxu0 0
        %1007 = vmatprep.subr.bf16.mxu0 0
        %1008 = vmatpush1.bf16.msra.mxu0 %v991
        %1009 = vmatprep.subr.bf16.mxu0 0
        %1010 = vmatpush2.bf16.msra.mxu0 0
        %1011 = vmatprep.subr.bf16.mxu0 0
        %1012 = vmatpush2.bf16.msra.mxu0 0
        %1013 = vmatprep.subr.bf16.mxu0 0
        %1014 = vmatpush2.bf16.msra.mxu0 0
        %1015 = vmatprep.subr.bf16.mxu0 0
        %1016 = vmatpush2.bf16.msra.mxu0 0
        %1017 = vmatprep.subr.bf16.mxu0 0
        %1018 = vmatpush2.bf16.msra.mxu0 0
        %1019 = vmatprep.subr.bf16.mxu0 0
        %1020 = vmatpush2.bf16.msra.mxu0 0
        %1021 = vmatprep.subr.bf16.mxu0 0
        %1022 = vmatpush2.bf16.msra.mxu0 0
        %1023 = vmatprep.subr.bf16.mxu0 0
        %1024 = vmatpush2.bf16.msra.mxu0 0
        %1025 = vmatprep.mubr.bf16.mxu0 0
        %1026 = vmatmul.mubr.bf16.gmra.mxu0 %v727
        %v1027 = vpop.f32.mrf.mxu0
        %v1028 = vadd.f32 0.0, %v1027
        %v1029 = vpop.f32.mrf.mxu0
        %v1030 = vpop.f32.mrf.mxu0
        %v1031 = vpop.f32.mrf.mxu0
        %1032 = vdwg.mxu0
        %1034 = vrot.lane.b32.xlu0 %v386, 120
        %v1035 = vpop.permute.xlu0 %1034
        %1037 = vmatprep.subr.bf16.mxu0 0
        %1038 = vmatpush1.bf16.msra.mxu0 0
        %1039 = vmatprep.subr.bf16.mxu0 0
        %1040 = vmatpush1.bf16.msra.mxu0 0
        %1041 = vmatprep.subr.bf16.mxu0 0
        %1042 = vmatpush1.bf16.msra.mxu0 0
        %1043 = vmatprep.subr.bf16.mxu0 0
        %1044 = vmatpush1.bf16.msra.mxu0 0
        %1045 = vmatprep.subr.bf16.mxu0 0
        %1046 = vmatpush1.bf16.msra.mxu0 0
        %1047 = vmatprep.subr.bf16.mxu0 0
        %1048 = vmatpush1.bf16.msra.mxu0 0
        %1049 = vmatprep.subr.bf16.mxu0 0
        %1050 = vmatpush1.bf16.msra.mxu0 0
        %1051 = vmatprep.subr.bf16.mxu0 0
        %1052 = vmatpush1.bf16.msra.mxu0 %v1035
        %1053 = vmatprep.subr.bf16.mxu0 0
        %1054 = vmatpush2.bf16.msra.mxu0 0
        %1055 = vmatprep.subr.bf16.mxu0 0
        %1056 = vmatpush2.bf16.msra.mxu0 0
        %1057 = vmatprep.subr.bf16.mxu0 0
        %1058 = vmatpush2.bf16.msra.mxu0 0
        %1059 = vmatprep.subr.bf16.mxu0 0
        %1060 = vmatpush2.bf16.msra.mxu0 0
        %1061 = vmatprep.subr.bf16.mxu0 0
        %1062 = vmatpush2.bf16.msra.mxu0 0
        %1063 = vmatprep.subr.bf16.mxu0 0
        %1064 = vmatpush2.bf16.msra.mxu0 0
        %1065 = vmatprep.subr.bf16.mxu0 0
        %1066 = vmatpush2.bf16.msra.mxu0 0
        %1067 = vmatprep.subr.bf16.mxu0 0
        %1068 = vmatpush2.bf16.msra.mxu0 0
        %1069 = vmatprep.mubr.bf16.mxu0 0
        %1070 = vmatmul.mubr.bf16.gmra.mxu0 %v727
        %v1071 = vpop.f32.mrf.mxu0
        %v1072 = vadd.f32 0.0, %v1071
        %v1073 = vpop.f32.mrf.mxu0
        %v1074 = vpop.f32.mrf.mxu0
        %v1075 = vpop.f32.mrf.mxu0
        %1076 = vdwg.mxu0
        %s1077 = scalar_lea.vmem %s179, 64 [#allocation2]
        %1078 = vst.msk [vmem:[%s1077] sm:$0xff] %vm711, %v764
        %1079 = vst.msk [vmem:[%s1077 + $0x8] sm:$0xff] %vm711, %v808
        %1080 = vst.msk [vmem:[%s1077 + $0x10] sm:$0xff] %vm711, %v852
        %1081 = vst.msk [vmem:[%s1077 + $0x18] sm:$0xff] %vm711, %v896
        %1082 = vst.msk [vmem:[%s1077 + $0x20] sm:$0xff] %vm711, %v940
        %1083 = vst.msk [vmem:[%s1077 + $0x28] sm:$0xff] %vm711, %v984
        %1084 = vst.msk [vmem:[%s1077 + $0x30] sm:$0xff] %vm711, %v1028
        %1085 = vst.msk [vmem:[%s1077 + $0x38] sm:$0xff] %vm711, %v1072
        %s1086 = sand.u32 %s98, 1
        %s1087 = scalar_lea.sflag [#allocation3], %s1086
        %s1088 = sand.u32 %s98, 1
        %s1089 = smul.addr %s1088, 128
        %s1090 = scalar_lea.vmem [#allocation2], %s1089
        // Predicated region
        $region33: #{tpu_custom_call.1} parent=31 // pred_check
          %p1091 = pneg %p108
        $region34: #{tpu_custom_call.1} parent=31 // pred_check_branch
          %1093 = sbr.rel (%p1091) target = $region36
        $region35: #{tpu_custom_call.1} parent=31 // pred_region
          %s1094 = smul.u32 2, %s17
          %s1096 = ssub.s32 2048, 2048
          %1097 = vsyncadd %s1087, %s1096
          %s1098 = smul.addr %s1094, 8
          %s1099 = smul.addr %s1098, 128
          %s1100 = scalar_lea.hbm %s3, %s1099
          %s1101 = sshll.u32 %s1090, 4
          %s1102 = int_to_ptr.vmem [resolvable:$true] %s1101
          %1107 = dma.vmem_to_hbm [thread:$0]  %s1102, 2048, %s1100, %s1087, 128, 128, 8
        $region36: #{tpu_custom_call.1} parent=31 // pred_fallthru
          _
      $region32: #{tpu_custom_call.1} parent=5 // pred_fallthru
        _
      %p1108 = scmp.le.s32.totalorder 2, %s12
      // Predicated region
      $region37: #{tpu_custom_call.1} parent=5 // pred_check
        %p1109 = pneg %p1108
      $region38: #{tpu_custom_call.1} parent=5 // pred_check_branch
        %1111 = sbr.rel (%p1109) target = $region40
      $region39: #{tpu_custom_call.1} parent=5 // pred_region
        %s1112 = ssub.s32 %s12, 2
        // Predicated region
        $region41: #{tpu_custom_call.1} parent=39 // pred_check
          %p1113 = pneg %p114
        $region42: #{tpu_custom_call.1} parent=39 // pred_check_branch
          %1115 = sbr.rel (%p1113) target = $region44
        $region43: #{tpu_custom_call.1} parent=39 // pred_region
          %s1116 = sand.u32 %s99, 1
          %s1117 = scalar_lea.sflag [#allocation3], %s1116
          %s1118 = sand.u32 %s99, 1
          %s1119 = smul.addr %s1118, 128
          %s1120 = scalar_lea.vmem [#allocation2], %s1119
          %1121 = dma.done %s1117, 2048
        $region44: #{tpu_custom_call.1} parent=39 // pred_fallthru
          _
      $region40: #{tpu_custom_call.1} parent=5 // pred_fallthru
        _
    $region6: #{tpu_custom_call.1} parent=1 // loop_footer
      %s16 = sadd.s32 1, %s12
    $region7: #{tpu_custom_call.1} parent=1 // loop_footer_branch
      %11 = sbr.rel target = $region3
    $region8: #{tpu_custom_call.1} parent=1 // loop_exit
      _
    %1122 = vsyncpa [#allocation3], 1
    %s1123 = scalar_lea.sflag [#allocation3], 1
    %1124 = vsyncpa %s1123, 1

</llo_original>
